<compile_context>
chip_gen: v5e
topology: v5e:2x2
jax: 0.10.0
libtpu: 0.0.40
codegen_flags: <defaults>
</compile_context>

<pallas_src>
import functools
import math

import jax
import jax.numpy as jnp
from jax.experimental import pallas as pl
from jax.experimental.pallas import tpu as pltpu


CFG = dict(vocab=128, max_pos=16, type_vocab=2, hidden=32, heads=2,
           intermediate=64, layers=2, n_classes=6, seq=8, batch=2)
N_PAD = 128   # lane-dense classifier output width (sliced to n_classes outside)
DROPOUT_P = 0.3


# ------------------------------ fused kernel -------------------------------- #

def _ln(x, g, b, eps=1e-12):
    """Row-wise LayerNorm in f32 (BERT eps=1e-12)."""
    mean = jnp.mean(x, axis=-1, keepdims=True)
    var = jnp.mean(jnp.square(x - mean), axis=-1, keepdims=True)
    return (x - mean) * jax.lax.rsqrt(var + eps) * g + b


def _fused_bert_kernel(
        emb_ref, maskb_ref, drop_ref,
        emb_ln_g_ref, emb_ln_b_ref,
        wqkv_ref, bqkv_ref, wo_ref, bo_ref, ln1_g_ref, ln1_b_ref,
        w1_ref, b1_ref, w2_ref, b2_ref, ln2_g_ref, ln2_b_ref,
        pool_w_ref, pool_b_ref, clsw_ref, clsb_ref,
        out_ref, ctx_ref,
        *, n_layers, batch, seq, hidden, heads):
    hd = hidden // heads
    scale = 1.0 / math.sqrt(hd)

    # Embedding LayerNorm.
    x = _ln(emb_ref[...], emb_ln_g_ref[...], emb_ln_b_ref[...])   # (B*S, H) f32
    maskb = maskb_ref[...]                                         # (B, S) additive key bias

    for l in range(n_layers):   # static unroll (L=2), activation stays in VMEM/vregs
        # Fused QKV projection: (B*S, H) @ (H, 3H).
        qkv = jnp.dot(x.astype(jnp.bfloat16), wqkv_ref[l],
                      preferred_element_type=jnp.float32) + bqkv_ref[l]

        # Attention per (batch, head); context written into VMEM scratch.
        for b in range(batch):
            r0 = b * seq
            blk = qkv[r0:r0 + seq, :]                 # (S, 3H)
            mb = maskb[b:b + 1, :]                    # (1, S)
            for h in range(heads):
                c0 = h * hd
                q = blk[:, c0:c0 + hd]                            # (S, HD)
                k = blk[:, hidden + c0:hidden + c0 + hd]          # (S, HD)
                v = blk[:, 2 * hidden + c0:2 * hidden + c0 + hd]  # (S, HD)
                # Contract on last dims of q and k (no explicit transpose).
                s = jax.lax.dot_general(
                    q, k, (((1,), (1,)), ((), ())),
                    preferred_element_type=jnp.float32) * scale + mb
                p = jax.nn.softmax(s, axis=-1)
                ctx_ref[r0:r0 + seq, c0:c0 + hd] = jnp.dot(
                    p, v, preferred_element_type=jnp.float32)

        # Output projection + residual + LN1.
        attn_out = jnp.dot(ctx_ref[...].astype(jnp.bfloat16), wo_ref[l],
                           preferred_element_type=jnp.float32) + bo_ref[l]
        x = _ln(x + attn_out, ln1_g_ref[l], ln1_b_ref[l])

        # FFN (w1 -> GELU -> w2) + residual + LN2.
        h1 = jnp.dot(x.astype(jnp.bfloat16), w1_ref[l],
                     preferred_element_type=jnp.float32) + b1_ref[l]
        # TODO(synk): HF BERT uses exact erf-GELU; tanh approximation used here (EUP friendly).
        h1 = jax.nn.gelu(h1, approximate=True)
        ffn = jnp.dot(h1.astype(jnp.bfloat16), w2_ref[l],
                      preferred_element_type=jnp.float32) + b2_ref[l]
        x = _ln(x + ffn, ln2_g_ref[l], ln2_b_ref[l])

    # Pooler: tanh(W @ hidden[:, 0]) on the [CLS] token of each sequence.
    cls = jnp.concatenate([x[b * seq:b * seq + 1, :] for b in range(batch)], axis=0)
    pooled = jnp.tanh(jnp.dot(cls.astype(jnp.bfloat16), pool_w_ref[...],
                              preferred_element_type=jnp.float32) + pool_b_ref[...])

    # nn.Dropout(0.3): pre-scaled keep-mask supplied from the wrapper.
    dropped = pooled * drop_ref[...]

    # Classifier head, lane-dense (H, 128) padded weights.
    out_ref[...] = jnp.dot(dropped.astype(jnp.bfloat16), clsw_ref[...],
                           preferred_element_type=jnp.float32) + clsb_ref[...]


# ------------------------------ params & glue -------------------------------- #

def init_params(key):
    H, I, L = CFG["hidden"], CFG["intermediate"], CFG["layers"]
    wdt = jnp.bfloat16   # MXU-native weight dtype; accumulation stays f32

    def nrm(k, shape, dtype=jnp.float32):
        return (jax.random.normal(k, shape, jnp.float32) * 0.02).astype(dtype)

    ks = iter(jax.random.split(key, 16))
    cls_w = jnp.zeros((H, N_PAD), wdt).at[:, :CFG["n_classes"]].set(
        nrm(next(ks), (H, CFG["n_classes"]), wdt))
    return {
        "word_emb": nrm(next(ks), (CFG["vocab"], H)),
        "pos_emb": nrm(next(ks), (CFG["max_pos"], H)),
        "type_emb": nrm(next(ks), (CFG["type_vocab"], H)),
        "emb_ln_g": jnp.ones((1, H), jnp.float32),
        "emb_ln_b": jnp.zeros((1, H), jnp.float32),
        # Per-layer weights stacked on a leading (L, ...) axis; QKV fused.
        "wqkv": nrm(next(ks), (L, H, 3 * H), wdt),
        "bqkv": jnp.zeros((L, 1, 3 * H), jnp.float32),
        "wo": nrm(next(ks), (L, H, H), wdt),
        "bo": jnp.zeros((L, 1, H), jnp.float32),
        "ln1_g": jnp.ones((L, 1, H), jnp.float32),
        "ln1_b": jnp.zeros((L, 1, H), jnp.float32),
        "w1": nrm(next(ks), (L, H, I), wdt),
        "b1": jnp.zeros((L, 1, I), jnp.float32),
        "w2": nrm(next(ks), (L, I, H), wdt),
        "b2": jnp.zeros((L, 1, H), jnp.float32),
        "ln2_g": jnp.ones((L, 1, H), jnp.float32),
        "ln2_b": jnp.zeros((L, 1, H), jnp.float32),
        "pool_w": nrm(next(ks), (H, H), wdt),
        "pool_b": jnp.zeros((1, H), jnp.float32),
        "cls_w": cls_w,
        "cls_b": jnp.zeros((1, N_PAD), jnp.float32),
    }


@functools.partial(jax.jit, static_argnames=("training",))
def emotion_classifier_forward(params, input_ids, attention_mask, dropout_key,
                               training=True):
    B, S = input_ids.shape
    H = CFG["hidden"]

    # Embedding gather + sum (glue JAX); LayerNorm happens inside the kernel.
    emb = (jnp.take(params["word_emb"], input_ids, axis=0)
           + params["pos_emb"][:S][None, :, :]
           + params["type_emb"][0][None, None, :]).reshape(B * S, H)

    # Additive attention-mask bias for key positions (HF: (1-mask)*large_negative).
    mask_bias = (1.0 - attention_mask.astype(jnp.float32)) * -1e9   # (B, S)

    # Classifier dropout keep-mask (pre-scaled). Identity in eval mode.
    if training:
        keep = jax.random.bernoulli(dropout_key, 1.0 - DROPOUT_P, (B, H))
        drop_mask = keep.astype(jnp.float32) / (1.0 - DROPOUT_P)
    else:
        drop_mask = jnp.ones((B, H), jnp.float32)

    vmem = pl.BlockSpec(memory_space=pltpu.MemorySpace.VMEM)
    kernel = functools.partial(
        _fused_bert_kernel,
        n_layers=CFG["layers"], batch=B, seq=S, hidden=H, heads=CFG["heads"])

    logits_pad = pl.pallas_call(
        kernel,
        out_shape=jax.ShapeDtypeStruct((B, N_PAD), jnp.float32),
        in_specs=[vmem] * 21,
        out_specs=vmem,
        scratch_shapes=[pltpu.VMEM((B * S, H), jnp.float32)],   # attention context buffer
    )(emb, mask_bias, drop_mask,
      params["emb_ln_g"], params["emb_ln_b"],
      params["wqkv"], params["bqkv"], params["wo"], params["bo"],
      params["ln1_g"], params["ln1_b"],
      params["w1"], params["b1"], params["w2"], params["b2"],
      params["ln2_g"], params["ln2_b"],
      params["pool_w"], params["pool_b"], params["cls_w"], params["cls_b"])

    return logits_pad[:, :CFG["n_classes"]]


# ------------------------------------ main ----------------------------------- #

if __name__ == "__main__":
    key = jax.random.PRNGKey(0)
    pkey, ikey, dkey = jax.random.split(key, 3)

    params = init_params(pkey)

    B, S = CFG["batch"], CFG["seq"]
    input_ids = jax.random.randint(ikey, (B, S), 0, CFG["vocab"], dtype=jnp.int32)
    attention_mask = jnp.array([[1, 1, 1, 1, 1, 1, 0, 0],
                                [1, 1, 1, 1, 0, 0, 0, 0]], dtype=jnp.int32)

    logits = emotion_classifier_forward(params, input_ids, attention_mask, dkey,
                                        training=True)
    logits = jax.block_until_ready(logits)

    assert logits.shape == (B, CFG["n_classes"])
    assert bool(jnp.all(jnp.isfinite(logits)))
    print("KERNEL_OK")
</pallas_src>

<mosaic_0001>
module attributes {stable_mosaic.version = 11 : i64} {
  func.func @_fused_bert_kernel(%arg0: memref<16x32xf32, #tpu.memory_space<vmem>>, %arg1: memref<2x8xf32, #tpu.memory_space<vmem>>, %arg2: memref<2x32xf32, #tpu.memory_space<vmem>>, %arg3: memref<1x32xf32, #tpu.memory_space<vmem>>, %arg4: memref<1x32xf32, #tpu.memory_space<vmem>>, %arg5: memref<2x32x96xbf16, #tpu.memory_space<vmem>>, %arg6: memref<2x1x96xf32, #tpu.memory_space<vmem>>, %arg7: memref<2x32x32xbf16, #tpu.memory_space<vmem>>, %arg8: memref<2x1x32xf32, #tpu.memory_space<vmem>>, %arg9: memref<2x1x32xf32, #tpu.memory_space<vmem>>, %arg10: memref<2x1x32xf32, #tpu.memory_space<vmem>>, %arg11: memref<2x32x64xbf16, #tpu.memory_space<vmem>>, %arg12: memref<2x1x64xf32, #tpu.memory_space<vmem>>, %arg13: memref<2x64x32xbf16, #tpu.memory_space<vmem>>, %arg14: memref<2x1x32xf32, #tpu.memory_space<vmem>>, %arg15: memref<2x1x32xf32, #tpu.memory_space<vmem>>, %arg16: memref<2x1x32xf32, #tpu.memory_space<vmem>>, %arg17: memref<32x32xbf16, #tpu.memory_space<vmem>>, %arg18: memref<1x32xf32, #tpu.memory_space<vmem>>, %arg19: memref<32x128xbf16, #tpu.memory_space<vmem>>, %arg20: memref<1x128xf32, #tpu.memory_space<vmem>>, %arg21: memref<2x128xf32, #tpu.memory_space<vmem>>, %arg22: memref<16x32xf32, #tpu.memory_space<vmem>>) attributes {dimension_semantics = [], scalar_prefetch = 0 : i64, scratch_operands = 1 : i64, tpu.core_type = #tpu.core_type<tc>} {
    %c0 = arith.constant 0 : index
    %c0_0 = arith.constant 0 : index
    %0 = vector.load %arg0[%c0, %c0_0] : memref<16x32xf32, #tpu.memory_space<vmem>>, vector<16x32xf32>
    %c0_1 = arith.constant 0 : index
    %c0_2 = arith.constant 0 : index
    %1 = vector.load %arg3[%c0_1, %c0_2] : memref<1x32xf32, #tpu.memory_space<vmem>>, vector<1x32xf32>
    %c0_3 = arith.constant 0 : index
    %c0_4 = arith.constant 0 : index
    %2 = vector.load %arg4[%c0_3, %c0_4] : memref<1x32xf32, #tpu.memory_space<vmem>>, vector<1x32xf32>
    %cst = arith.constant dense<0.000000e+00> : vector<16xf32>
    %3 = vector.multi_reduction <add>, %0, %cst [1] : vector<16x32xf32> to vector<16xf32>
    %4 = vector.shape_cast %3 : vector<16xf32> to vector<16x1xf32>
    %cst_5 = arith.constant 3.200000e+01 : f32
    %5 = vector.broadcast %cst_5 : f32 to vector<16x1xf32>
    %6 = arith.divf %4, %5 : vector<16x1xf32>
    %7 = vector.broadcast %6 : vector<16x1xf32> to vector<16x32xf32>
    %8 = arith.subf %0, %7 : vector<16x32xf32>
    %9 = arith.mulf %8, %8 : vector<16x32xf32>
    %cst_6 = arith.constant dense<0.000000e+00> : vector<16xf32>
    %10 = vector.multi_reduction <add>, %9, %cst_6 [1] : vector<16x32xf32> to vector<16xf32>
    %11 = vector.shape_cast %10 : vector<16xf32> to vector<16x1xf32>
    %cst_7 = arith.constant 3.200000e+01 : f32
    %12 = vector.broadcast %cst_7 : f32 to vector<16x1xf32>
    %13 = arith.divf %11, %12 : vector<16x1xf32>
    %14 = vector.broadcast %6 : vector<16x1xf32> to vector<16x32xf32>
    %15 = arith.subf %0, %14 : vector<16x32xf32>
    %cst_8 = arith.constant 9.99999996E-13 : f32
    %16 = vector.broadcast %cst_8 : f32 to vector<16x1xf32>
    %17 = arith.addf %13, %16 : vector<16x1xf32>
    %18 = math.rsqrt %17 : vector<16x1xf32>
    %19 = vector.broadcast %18 : vector<16x1xf32> to vector<16x32xf32>
    %20 = arith.mulf %15, %19 : vector<16x32xf32>
    %21 = vector.broadcast %1 : vector<1x32xf32> to vector<16x32xf32>
    %22 = arith.mulf %20, %21 : vector<16x32xf32>
    %23 = vector.broadcast %2 : vector<1x32xf32> to vector<16x32xf32>
    %24 = arith.addf %22, %23 : vector<16x32xf32>
    %c0_9 = arith.constant 0 : index
    %c0_10 = arith.constant 0 : index
    %25 = vector.load %arg1[%c0_9, %c0_10] : memref<2x8xf32, #tpu.memory_space<vmem>>, vector<2x8xf32>
    %26 = arith.truncf %24 : vector<16x32xf32> to vector<16x32xbf16>
    %c0_11 = arith.constant 0 : index
    %c0_12 = arith.constant 0 : index
    %c0_13 = arith.constant 0 : index
    %27 = vector.load %arg5[%c0_11, %c0_12, %c0_13] : memref<2x32x96xbf16, #tpu.memory_space<vmem>>, vector<1x32x96xbf16>
    %28 = vector.shape_cast %27 : vector<1x32x96xbf16> to vector<32x96xbf16>
    %cst_14 = arith.constant dense<0.000000e+00> : vector<16x96xf32>
    %29 = tpu.matmul %26, %28, %cst_14 {dimension_numbers = #tpu.dot_dimension_numbers<[1], [0], [0], [1], [0, 0, 1, 1], [], []>} : vector<16x32xbf16>, vector<32x96xbf16>, vector<16x96xf32> -> vector<16x96xf32>
    %c0_15 = arith.constant 0 : index
    %c0_16 = arith.constant 0 : index
    %c0_17 = arith.constant 0 : index
    %30 = vector.load %arg6[%c0_15, %c0_16, %c0_17] : memref<2x1x96xf32, #tpu.memory_space<vmem>>, vector<1x1x96xf32>
    %31 = vector.shape_cast %30 : vector<1x1x96xf32> to vector<1x96xf32>
    %32 = vector.broadcast %31 : vector<1x96xf32> to vector<16x96xf32>
    %33 = arith.addf %29, %32 : vector<16x96xf32>
    %34 = vector.extract_strided_slice %33 {offsets = [0, 0], sizes = [8, 96], strides = [1, 1]} : vector<16x96xf32> to vector<8x96xf32>
    %35 = vector.extract_strided_slice %25 {offsets = [0, 0], sizes = [1, 8], strides = [1, 1]} : vector<2x8xf32> to vector<1x8xf32>
    %36 = vector.extract_strided_slice %34 {offsets = [0, 0], sizes = [8, 16], strides = [1, 1]} : vector<8x96xf32> to vector<8x16xf32>
    %37 = vector.extract_strided_slice %34 {offsets = [0, 32], sizes = [8, 16], strides = [1, 1]} : vector<8x96xf32> to vector<8x16xf32>
    %38 = vector.extract_strided_slice %34 {offsets = [0, 64], sizes = [8, 16], strides = [1, 1]} : vector<8x96xf32> to vector<8x16xf32>
    %cst_18 = arith.constant dense<0.000000e+00> : vector<8x8xf32>
    %39 = tpu.matmul %36, %37, %cst_18 {dimension_numbers = #tpu.dot_dimension_numbers<[1], [1], [0], [0], [0, 0, 1, 0], [], []>} : vector<8x16xf32>, vector<8x16xf32>, vector<8x8xf32> -> vector<8x8xf32>
    %cst_19 = arith.constant 2.500000e-01 : f32
    %40 = vector.broadcast %cst_19 : f32 to vector<8x8xf32>
    %41 = arith.mulf %39, %40 : vector<8x8xf32>
    %42 = vector.broadcast %35 : vector<1x8xf32> to vector<8x8xf32>
    %43 = arith.addf %41, %42 : vector<8x8xf32>
    %cst_20 = arith.constant dense<0xFF800000> : vector<8xf32>
    %44 = vector.multi_reduction <maximumf>, %43, %cst_20 [1] : vector<8x8xf32> to vector<8xf32>
    %cst_21 = arith.constant 0xFF800000 : f32
    %45 = vector.broadcast %cst_21 : f32 to vector<8xf32>
    %46 = arith.maximumf %45, %44 : vector<8xf32>
    %47 = vector.shape_cast %46 : vector<8xf32> to vector<8x1xf32>
    %48 = vector.broadcast %47 : vector<8x1xf32> to vector<8x8xf32>
    %49 = arith.subf %43, %48 : vector<8x8xf32>
    %50 = math.exp %49 : vector<8x8xf32>
    %cst_22 = arith.constant dense<0.000000e+00> : vector<8xf32>
    %51 = vector.multi_reduction <add>, %50, %cst_22 [1] : vector<8x8xf32> to vector<8xf32>
    %52 = vector.shape_cast %51 : vector<8xf32> to vector<8x1xf32>
    %53 = vector.broadcast %52 : vector<8x1xf32> to vector<8x8xf32>
    %54 = arith.divf %50, %53 : vector<8x8xf32>
    %cst_23 = arith.constant dense<0.000000e+00> : vector<8x16xf32>
    %55 = tpu.matmul %54, %38, %cst_23 {dimension_numbers = #tpu.dot_dimension_numbers<[1], [0], [0], [1], [0, 0, 1, 1], [], []>} : vector<8x8xf32>, vector<8x16xf32>, vector<8x16xf32> -> vector<8x16xf32>
    %c0_24 = arith.constant 0 : index
    %c0_25 = arith.constant 0 : index
    %56 = vector.load %arg22[%c0_24, %c0_25] : memref<16x32xf32, #tpu.memory_space<vmem>>, vector<8x16xf32>
    tpu.vector_store %arg22[%c0_24, %c0_25], %55 {strides = array<i32>} : memref<16x32xf32, #tpu.memory_space<vmem>>, vector<8x16xf32>,
    %57 = vector.extract_strided_slice %34 {offsets = [0, 16], sizes = [8, 16], strides = [1, 1]} : vector<8x96xf32> to vector<8x16xf32>
    %58 = vector.extract_strided_slice %34 {offsets = [0, 48], sizes = [8, 16], strides = [1, 1]} : vector<8x96xf32> to vector<8x16xf32>
    %59 = vector.extract_strided_slice %34 {offsets = [0, 80], sizes = [8, 16], strides = [1, 1]} : vector<8x96xf32> to vector<8x16xf32>
    %cst_26 = arith.constant dense<0.000000e+00> : vector<8x8xf32>
    %60 = tpu.matmul %57, %58, %cst_26 {dimension_numbers = #tpu.dot_dimension_numbers<[1], [1], [0], [0], [0, 0, 1, 0], [], []>} : vector<8x16xf32>, vector<8x16xf32>, vector<8x8xf32> -> vector<8x8xf32>
    %cst_27 = arith.constant 2.500000e-01 : f32
    %61 = vector.broadcast %cst_27 : f32 to vector<8x8xf32>
    %62 = arith.mulf %60, %61 : vector<8x8xf32>
    %63 = vector.broadcast %35 : vector<1x8xf32> to vector<8x8xf32>
    %64 = arith.addf %62, %63 : vector<8x8xf32>
    %cst_28 = arith.constant dense<0xFF800000> : vector<8xf32>
    %65 = vector.multi_reduction <maximumf>, %64, %cst_28 [1] : vector<8x8xf32> to vector<8xf32>
    %cst_29 = arith.constant 0xFF800000 : f32
    %66 = vector.broadcast %cst_29 : f32 to vector<8xf32>
    %67 = arith.maximumf %66, %65 : vector<8xf32>
    %68 = vector.shape_cast %67 : vector<8xf32> to vector<8x1xf32>
    %69 = vector.broadcast %68 : vector<8x1xf32> to vector<8x8xf32>
    %70 = arith.subf %64, %69 : vector<8x8xf32>
    %71 = math.exp %70 : vector<8x8xf32>
    %cst_30 = arith.constant dense<0.000000e+00> : vector<8xf32>
    %72 = vector.multi_reduction <add>, %71, %cst_30 [1] : vector<8x8xf32> to vector<8xf32>
    %73 = vector.shape_cast %72 : vector<8xf32> to vector<8x1xf32>
    %74 = vector.broadcast %73 : vector<8x1xf32> to vector<8x8xf32>
    %75 = arith.divf %71, %74 : vector<8x8xf32>
    %cst_31 = arith.constant dense<0.000000e+00> : vector<8x16xf32>
    %76 = tpu.matmul %75, %59, %cst_31 {dimension_numbers = #tpu.dot_dimension_numbers<[1], [0], [0], [1], [0, 0, 1, 1], [], []>} : vector<8x8xf32>, vector<8x16xf32>, vector<8x16xf32> -> vector<8x16xf32>
    %c0_32 = arith.constant 0 : index
    %c16 = arith.constant 16 : index
    %77 = vector.load %arg22[%c0_32, %c16] : memref<16x32xf32, #tpu.memory_space<vmem>>, vector<8x16xf32>
    tpu.vector_store %arg22[%c0_32, %c16], %76 {strides = array<i32>} : memref<16x32xf32, #tpu.memory_space<vmem>>, vector<8x16xf32>,
    %78 = vector.extract_strided_slice %33 {offsets = [8, 0], sizes = [8, 96], strides = [1, 1]} : vector<16x96xf32> to vector<8x96xf32>
    %79 = vector.extract_strided_slice %25 {offsets = [1, 0], sizes = [1, 8], strides = [1, 1]} : vector<2x8xf32> to vector<1x8xf32>
    %80 = vector.extract_strided_slice %78 {offsets = [0, 0], sizes = [8, 16], strides = [1, 1]} : vector<8x96xf32> to vector<8x16xf32>
    %81 = vector.extract_strided_slice %78 {offsets = [0, 32], sizes = [8, 16], strides = [1, 1]} : vector<8x96xf32> to vector<8x16xf32>
    %82 = vector.extract_strided_slice %78 {offsets = [0, 64], sizes = [8, 16], strides = [1, 1]} : vector<8x96xf32> to vector<8x16xf32>
    %cst_33 = arith.constant dense<0.000000e+00> : vector<8x8xf32>
    %83 = tpu.matmul %80, %81, %cst_33 {dimension_numbers = #tpu.dot_dimension_numbers<[1], [1], [0], [0], [0, 0, 1, 0], [], []>} : vector<8x16xf32>, vector<8x16xf32>, vector<8x8xf32> -> vector<8x8xf32>
    %cst_34 = arith.constant 2.500000e-01 : f32
    %84 = vector.broadcast %cst_34 : f32 to vector<8x8xf32>
    %85 = arith.mulf %83, %84 : vector<8x8xf32>
    %86 = vector.broadcast %79 : vector<1x8xf32> to vector<8x8xf32>
    %87 = arith.addf %85, %86 : vector<8x8xf32>
    %cst_35 = arith.constant dense<0xFF800000> : vector<8xf32>
    %88 = vector.multi_reduction <maximumf>, %87, %cst_35 [1] : vector<8x8xf32> to vector<8xf32>
    %cst_36 = arith.constant 0xFF800000 : f32
    %89 = vector.broadcast %cst_36 : f32 to vector<8xf32>
    %90 = arith.maximumf %89, %88 : vector<8xf32>
    %91 = vector.shape_cast %90 : vector<8xf32> to vector<8x1xf32>
    %92 = vector.broadcast %91 : vector<8x1xf32> to vector<8x8xf32>
    %93 = arith.subf %87, %92 : vector<8x8xf32>
    %94 = math.exp %93 : vector<8x8xf32>
    %cst_37 = arith.constant dense<0.000000e+00> : vector<8xf32>
    %95 = vector.multi_reduction <add>, %94, %cst_37 [1] : vector<8x8xf32> to vector<8xf32>
    %96 = vector.shape_cast %95 : vector<8xf32> to vector<8x1xf32>
    %97 = vector.broadcast %96 : vector<8x1xf32> to vector<8x8xf32>
    %98 = arith.divf %94, %97 : vector<8x8xf32>
    %cst_38 = arith.constant dense<0.000000e+00> : vector<8x16xf32>
    %99 = tpu.matmul %98, %82, %cst_38 {dimension_numbers = #tpu.dot_dimension_numbers<[1], [0], [0], [1], [0, 0, 1, 1], [], []>} : vector<8x8xf32>, vector<8x16xf32>, vector<8x16xf32> -> vector<8x16xf32>
    %c8 = arith.constant 8 : index
    %c0_39 = arith.constant 0 : index
    %100 = vector.load %arg22[%c8, %c0_39] : memref<16x32xf32, #tpu.memory_space<vmem>>, vector<8x16xf32>
    tpu.vector_store %arg22[%c8, %c0_39], %99 {strides = array<i32>} : memref<16x32xf32, #tpu.memory_space<vmem>>, vector<8x16xf32>,
    %101 = vector.extract_strided_slice %78 {offsets = [0, 16], sizes = [8, 16], strides = [1, 1]} : vector<8x96xf32> to vector<8x16xf32>
    %102 = vector.extract_strided_slice %78 {offsets = [0, 48], sizes = [8, 16], strides = [1, 1]} : vector<8x96xf32> to vector<8x16xf32>
    %103 = vector.extract_strided_slice %78 {offsets = [0, 80], sizes = [8, 16], strides = [1, 1]} : vector<8x96xf32> to vector<8x16xf32>
    %cst_40 = arith.constant dense<0.000000e+00> : vector<8x8xf32>
    %104 = tpu.matmul %101, %102, %cst_40 {dimension_numbers = #tpu.dot_dimension_numbers<[1], [1], [0], [0], [0, 0, 1, 0], [], []>} : vector<8x16xf32>, vector<8x16xf32>, vector<8x8xf32> -> vector<8x8xf32>
    %cst_41 = arith.constant 2.500000e-01 : f32
    %105 = vector.broadcast %cst_41 : f32 to vector<8x8xf32>
    %106 = arith.mulf %104, %105 : vector<8x8xf32>
    %107 = vector.broadcast %79 : vector<1x8xf32> to vector<8x8xf32>
    %108 = arith.addf %106, %107 : vector<8x8xf32>
    %cst_42 = arith.constant dense<0xFF800000> : vector<8xf32>
    %109 = vector.multi_reduction <maximumf>, %108, %cst_42 [1] : vector<8x8xf32> to vector<8xf32>
    %cst_43 = arith.constant 0xFF800000 : f32
    %110 = vector.broadcast %cst_43 : f32 to vector<8xf32>
    %111 = arith.maximumf %110, %109 : vector<8xf32>
    %112 = vector.shape_cast %111 : vector<8xf32> to vector<8x1xf32>
    %113 = vector.broadcast %112 : vector<8x1xf32> to vector<8x8xf32>
    %114 = arith.subf %108, %113 : vector<8x8xf32>
    %115 = math.exp %114 : vector<8x8xf32>
    %cst_44 = arith.constant dense<0.000000e+00> : vector<8xf32>
    %116 = vector.multi_reduction <add>, %115, %cst_44 [1] : vector<8x8xf32> to vector<8xf32>
    %117 = vector.shape_cast %116 : vector<8xf32> to vector<8x1xf32>
    %118 = vector.broadcast %117 : vector<8x1xf32> to vector<8x8xf32>
    %119 = arith.divf %115, %118 : vector<8x8xf32>
    %cst_45 = arith.constant dense<0.000000e+00> : vector<8x16xf32>
    %120 = tpu.matmul %119, %103, %cst_45 {dimension_numbers = #tpu.dot_dimension_numbers<[1], [0], [0], [1], [0, 0, 1, 1], [], []>} : vector<8x8xf32>, vector<8x16xf32>, vector<8x16xf32> -> vector<8x16xf32>
    %c8_46 = arith.constant 8 : index
    %c16_47 = arith.constant 16 : index
    %121 = vector.load %arg22[%c8_46, %c16_47] : memref<16x32xf32, #tpu.memory_space<vmem>>, vector<8x16xf32>
    tpu.vector_store %arg22[%c8_46, %c16_47], %120 {strides = array<i32>} : memref<16x32xf32, #tpu.memory_space<vmem>>, vector<8x16xf32>,
    %c0_48 = arith.constant 0 : index
    %c0_49 = arith.constant 0 : index
    %122 = vector.load %arg22[%c0_48, %c0_49] : memref<16x32xf32, #tpu.memory_space<vmem>>, vector<16x32xf32>
    %123 = arith.truncf %122 : vector<16x32xf32> to vector<16x32xbf16>
    %c0_50 = arith.constant 0 : index
    %c0_51 = arith.constant 0 : index
    %c0_52 = arith.constant 0 : index
    %124 = vector.load %arg7[%c0_50, %c0_51, %c0_52] : memref<2x32x32xbf16, #tpu.memory_space<vmem>>, vector<1x32x32xbf16>
    %125 = vector.shape_cast %124 : vector<1x32x32xbf16> to vector<32x32xbf16>
    %cst_53 = arith.constant dense<0.000000e+00> : vector<16x32xf32>
    %126 = tpu.matmul %123, %125, %cst_53 {dimension_numbers = #tpu.dot_dimension_numbers<[1], [0], [0], [1], [0, 0, 1, 1], [], []>} : vector<16x32xbf16>, vector<32x32xbf16>, vector<16x32xf32> -> vector<16x32xf32>
    %c0_54 = arith.constant 0 : index
    %c0_55 = arith.constant 0 : index
    %c0_56 = arith.constant 0 : index
    %127 = vector.load %arg8[%c0_54, %c0_55, %c0_56] : memref<2x1x32xf32, #tpu.memory_space<vmem>>, vector<1x1x32xf32>
    %128 = vector.shape_cast %127 : vector<1x1x32xf32> to vector<1x32xf32>
    %129 = vector.broadcast %128 : vector<1x32xf32> to vector<16x32xf32>
    %130 = arith.addf %126, %129 : vector<16x32xf32>
    %131 = arith.addf %24, %130 : vector<16x32xf32>
    %c0_57 = arith.constant 0 : index
    %c0_58 = arith.constant 0 : index
    %c0_59 = arith.constant 0 : index
    %132 = vector.load %arg9[%c0_57, %c0_58, %c0_59] : memref<2x1x32xf32, #tpu.memory_space<vmem>>, vector<1x1x32xf32>
    %133 = vector.shape_cast %132 : vector<1x1x32xf32> to vector<1x32xf32>
    %c0_60 = arith.constant 0 : index
    %c0_61 = arith.constant 0 : index
    %c0_62 = arith.constant 0 : index
    %134 = vector.load %arg10[%c0_60, %c0_61, %c0_62] : memref<2x1x32xf32, #tpu.memory_space<vmem>>, vector<1x1x32xf32>
    %135 = vector.shape_cast %134 : vector<1x1x32xf32> to vector<1x32xf32>
    %cst_63 = arith.constant dense<0.000000e+00> : vector<16xf32>
    %136 = vector.multi_reduction <add>, %131, %cst_63 [1] : vector<16x32xf32> to vector<16xf32>
    %137 = vector.shape_cast %136 : vector<16xf32> to vector<16x1xf32>
    %cst_64 = arith.constant 3.200000e+01 : f32
    %138 = vector.broadcast %cst_64 : f32 to vector<16x1xf32>
    %139 = arith.divf %137, %138 : vector<16x1xf32>
    %140 = vector.broadcast %139 : vector<16x1xf32> to vector<16x32xf32>
    %141 = arith.subf %131, %140 : vector<16x32xf32>
    %142 = arith.mulf %141, %141 : vector<16x32xf32>
    %cst_65 = arith.constant dense<0.000000e+00> : vector<16xf32>
    %143 = vector.multi_reduction <add>, %142, %cst_65 [1] : vector<16x32xf32> to vector<16xf32>
    %144 = vector.shape_cast %143 : vector<16xf32> to vector<16x1xf32>
    %cst_66 = arith.constant 3.200000e+01 : f32
    %145 = vector.broadcast %cst_66 : f32 to vector<16x1xf32>
    %146 = arith.divf %144, %145 : vector<16x1xf32>
    %147 = vector.broadcast %139 : vector<16x1xf32> to vector<16x32xf32>
    %148 = arith.subf %131, %147 : vector<16x32xf32>
    %cst_67 = arith.constant 9.99999996E-13 : f32
    %149 = vector.broadcast %cst_67 : f32 to vector<16x1xf32>
    %150 = arith.addf %146, %149 : vector<16x1xf32>
    %151 = math.rsqrt %150 : vector<16x1xf32>
    %152 = vector.broadcast %151 : vector<16x1xf32> to vector<16x32xf32>
    %153 = arith.mulf %148, %152 : vector<16x32xf32>
    %154 = vector.broadcast %133 : vector<1x32xf32> to vector<16x32xf32>
    %155 = arith.mulf %153, %154 : vector<16x32xf32>
    %156 = vector.broadcast %135 : vector<1x32xf32> to vector<16x32xf32>
    %157 = arith.addf %155, %156 : vector<16x32xf32>
    %158 = arith.truncf %157 : vector<16x32xf32> to vector<16x32xbf16>
    %c0_68 = arith.constant 0 : index
    %c0_69 = arith.constant 0 : index
    %c0_70 = arith.constant 0 : index
    %159 = vector.load %arg11[%c0_68, %c0_69, %c0_70] : memref<2x32x64xbf16, #tpu.memory_space<vmem>>, vector<1x32x64xbf16>
    %160 = vector.shape_cast %159 : vector<1x32x64xbf16> to vector<32x64xbf16>
    %cst_71 = arith.constant dense<0.000000e+00> : vector<16x64xf32>
    %161 = tpu.matmul %158, %160, %cst_71 {dimension_numbers = #tpu.dot_dimension_numbers<[1], [0], [0], [1], [0, 0, 1, 1], [], []>} : vector<16x32xbf16>, vector<32x64xbf16>, vector<16x64xf32> -> vector<16x64xf32>
    %c0_72 = arith.constant 0 : index
    %c0_73 = arith.constant 0 : index
    %c0_74 = arith.constant 0 : index
    %162 = vector.load %arg12[%c0_72, %c0_73, %c0_74] : memref<2x1x64xf32, #tpu.memory_space<vmem>>, vector<1x1x64xf32>
    %163 = vector.shape_cast %162 : vector<1x1x64xf32> to vector<1x64xf32>
    %164 = vector.broadcast %163 : vector<1x64xf32> to vector<16x64xf32>
    %165 = arith.addf %161, %164 : vector<16x64xf32>
    %166 = arith.mulf %165, %165 : vector<16x64xf32>
    %167 = arith.mulf %165, %166 : vector<16x64xf32>
    %cst_75 = arith.constant 4.471500e-02 : f32
    %168 = vector.broadcast %cst_75 : f32 to vector<16x64xf32>
    %169 = arith.mulf %168, %167 : vector<16x64xf32>
    %170 = arith.addf %165, %169 : vector<16x64xf32>
    %cst_76 = arith.constant 0.797884583 : f32
    %171 = vector.broadcast %cst_76 : f32 to vector<16x64xf32>
    %172 = arith.mulf %171, %170 : vector<16x64xf32>
    %173 = math.tanh %172 : vector<16x64xf32>
    %cst_77 = arith.constant 1.000000e+00 : f32
    %174 = vector.broadcast %cst_77 : f32 to vector<16x64xf32>
    %175 = arith.addf %174, %173 : vector<16x64xf32>
    %cst_78 = arith.constant 5.000000e-01 : f32
    %176 = vector.broadcast %cst_78 : f32 to vector<16x64xf32>
    %177 = arith.mulf %176, %175 : vector<16x64xf32>
    %178 = arith.mulf %165, %177 : vector<16x64xf32>
    %179 = arith.truncf %178 : vector<16x64xf32> to vector<16x64xbf16>
    %c0_79 = arith.constant 0 : index
    %c0_80 = arith.constant 0 : index
    %c0_81 = arith.constant 0 : index
    %180 = vector.load %arg13[%c0_79, %c0_80, %c0_81] : memref<2x64x32xbf16, #tpu.memory_space<vmem>>, vector<1x64x32xbf16>
    %181 = vector.shape_cast %180 : vector<1x64x32xbf16> to vector<64x32xbf16>
    %cst_82 = arith.constant dense<0.000000e+00> : vector<16x32xf32>
    %182 = tpu.matmul %179, %181, %cst_82 {dimension_numbers = #tpu.dot_dimension_numbers<[1], [0], [0], [1], [0, 0, 1, 1], [], []>} : vector<16x64xbf16>, vector<64x32xbf16>, vector<16x32xf32> -> vector<16x32xf32>
    %c0_83 = arith.constant 0 : index
    %c0_84 = arith.constant 0 : index
    %c0_85 = arith.constant 0 : index
    %183 = vector.load %arg14[%c0_83, %c0_84, %c0_85] : memref<2x1x32xf32, #tpu.memory_space<vmem>>, vector<1x1x32xf32>
    %184 = vector.shape_cast %183 : vector<1x1x32xf32> to vector<1x32xf32>
    %185 = vector.broadcast %184 : vector<1x32xf32> to vector<16x32xf32>
    %186 = arith.addf %182, %185 : vector<16x32xf32>
    %187 = arith.addf %157, %186 : vector<16x32xf32>
    %c0_86 = arith.constant 0 : index
    %c0_87 = arith.constant 0 : index
    %c0_88 = arith.constant 0 : index
    %188 = vector.load %arg15[%c0_86, %c0_87, %c0_88] : memref<2x1x32xf32, #tpu.memory_space<vmem>>, vector<1x1x32xf32>
    %189 = vector.shape_cast %188 : vector<1x1x32xf32> to vector<1x32xf32>
    %c0_89 = arith.constant 0 : index
    %c0_90 = arith.constant 0 : index
    %c0_91 = arith.constant 0 : index
    %190 = vector.load %arg16[%c0_89, %c0_90, %c0_91] : memref<2x1x32xf32, #tpu.memory_space<vmem>>, vector<1x1x32xf32>
    %191 = vector.shape_cast %190 : vector<1x1x32xf32> to vector<1x32xf32>
    %cst_92 = arith.constant dense<0.000000e+00> : vector<16xf32>
    %192 = vector.multi_reduction <add>, %187, %cst_92 [1] : vector<16x32xf32> to vector<16xf32>
    %193 = vector.shape_cast %192 : vector<16xf32> to vector<16x1xf32>
    %cst_93 = arith.constant 3.200000e+01 : f32
    %194 = vector.broadcast %cst_93 : f32 to vector<16x1xf32>
    %195 = arith.divf %193, %194 : vector<16x1xf32>
    %196 = vector.broadcast %195 : vector<16x1xf32> to vector<16x32xf32>
    %197 = arith.subf %187, %196 : vector<16x32xf32>
    %198 = arith.mulf %197, %197 : vector<16x32xf32>
    %cst_94 = arith.constant dense<0.000000e+00> : vector<16xf32>
    %199 = vector.multi_reduction <add>, %198, %cst_94 [1] : vector<16x32xf32> to vector<16xf32>
    %200 = vector.shape_cast %199 : vector<16xf32> to vector<16x1xf32>
    %cst_95 = arith.constant 3.200000e+01 : f32
    %201 = vector.broadcast %cst_95 : f32 to vector<16x1xf32>
    %202 = arith.divf %200, %201 : vector<16x1xf32>
    %203 = vector.broadcast %195 : vector<16x1xf32> to vector<16x32xf32>
    %204 = arith.subf %187, %203 : vector<16x32xf32>
    %cst_96 = arith.constant 9.99999996E-13 : f32
    %205 = vector.broadcast %cst_96 : f32 to vector<16x1xf32>
    %206 = arith.addf %202, %205 : vector<16x1xf32>
    %207 = math.rsqrt %206 : vector<16x1xf32>
    %208 = vector.broadcast %207 : vector<16x1xf32> to vector<16x32xf32>
    %209 = arith.mulf %204, %208 : vector<16x32xf32>
    %210 = vector.broadcast %189 : vector<1x32xf32> to vector<16x32xf32>
    %211 = arith.mulf %209, %210 : vector<16x32xf32>
    %212 = vector.broadcast %191 : vector<1x32xf32> to vector<16x32xf32>
    %213 = arith.addf %211, %212 : vector<16x32xf32>
    %214 = arith.truncf %213 : vector<16x32xf32> to vector<16x32xbf16>
    %c1 = arith.constant 1 : index
    %c0_97 = arith.constant 0 : index
    %c0_98 = arith.constant 0 : index
    %215 = vector.load %arg5[%c1, %c0_97, %c0_98] : memref<2x32x96xbf16, #tpu.memory_space<vmem>>, vector<1x32x96xbf16>
    %216 = vector.shape_cast %215 : vector<1x32x96xbf16> to vector<32x96xbf16>
    %cst_99 = arith.constant dense<0.000000e+00> : vector<16x96xf32>
    %217 = tpu.matmul %214, %216, %cst_99 {dimension_numbers = #tpu.dot_dimension_numbers<[1], [0], [0], [1], [0, 0, 1, 1], [], []>} : vector<16x32xbf16>, vector<32x96xbf16>, vector<16x96xf32> -> vector<16x96xf32>
    %c1_100 = arith.constant 1 : index
    %c0_101 = arith.constant 0 : index
    %c0_102 = arith.constant 0 : index
    %218 = vector.load %arg6[%c1_100, %c0_101, %c0_102] : memref<2x1x96xf32, #tpu.memory_space<vmem>>, vector<1x1x96xf32>
    %219 = vector.shape_cast %218 : vector<1x1x96xf32> to vector<1x96xf32>
    %220 = vector.broadcast %219 : vector<1x96xf32> to vector<16x96xf32>
    %221 = arith.addf %217, %220 : vector<16x96xf32>
    %222 = vector.extract_strided_slice %221 {offsets = [0, 0], sizes = [8, 96], strides = [1, 1]} : vector<16x96xf32> to vector<8x96xf32>
    %223 = vector.extract_strided_slice %25 {offsets = [0, 0], sizes = [1, 8], strides = [1, 1]} : vector<2x8xf32> to vector<1x8xf32>
    %224 = vector.extract_strided_slice %222 {offsets = [0, 0], sizes = [8, 16], strides = [1, 1]} : vector<8x96xf32> to vector<8x16xf32>
    %225 = vector.extract_strided_slice %222 {offsets = [0, 32], sizes = [8, 16], strides = [1, 1]} : vector<8x96xf32> to vector<8x16xf32>
    %226 = vector.extract_strided_slice %222 {offsets = [0, 64], sizes = [8, 16], strides = [1, 1]} : vector<8x96xf32> to vector<8x16xf32>
    %cst_103 = arith.constant dense<0.000000e+00> : vector<8x8xf32>
    %227 = tpu.matmul %224, %225, %cst_103 {dimension_numbers = #tpu.dot_dimension_numbers<[1], [1], [0], [0], [0, 0, 1, 0], [], []>} : vector<8x16xf32>, vector<8x16xf32>, vector<8x8xf32> -> vector<8x8xf32>
    %cst_104 = arith.constant 2.500000e-01 : f32
    %228 = vector.broadcast %cst_104 : f32 to vector<8x8xf32>
    %229 = arith.mulf %227, %228 : vector<8x8xf32>
    %230 = vector.broadcast %223 : vector<1x8xf32> to vector<8x8xf32>
    %231 = arith.addf %229, %230 : vector<8x8xf32>
    %cst_105 = arith.constant dense<0xFF800000> : vector<8xf32>
    %232 = vector.multi_reduction <maximumf>, %231, %cst_105 [1] : vector<8x8xf32> to vector<8xf32>
    %cst_106 = arith.constant 0xFF800000 : f32
    %233 = vector.broadcast %cst_106 : f32 to vector<8xf32>
    %234 = arith.maximumf %233, %232 : vector<8xf32>
    %235 = vector.shape_cast %234 : vector<8xf32> to vector<8x1xf32>
    %236 = vector.broadcast %235 : vector<8x1xf32> to vector<8x8xf32>
    %237 = arith.subf %231, %236 : vector<8x8xf32>
    %238 = math.exp %237 : vector<8x8xf32>
    %cst_107 = arith.constant dense<0.000000e+00> : vector<8xf32>
    %239 = vector.multi_reduction <add>, %238, %cst_107 [1] : vector<8x8xf32> to vector<8xf32>
    %240 = vector.shape_cast %239 : vector<8xf32> to vector<8x1xf32>
    %241 = vector.broadcast %240 : vector<8x1xf32> to vector<8x8xf32>
    %242 = arith.divf %238, %241 : vector<8x8xf32>
    %cst_108 = arith.constant dense<0.000000e+00> : vector<8x16xf32>
    %243 = tpu.matmul %242, %226, %cst_108 {dimension_numbers = #tpu.dot_dimension_numbers<[1], [0], [0], [1], [0, 0, 1, 1], [], []>} : vector<8x8xf32>, vector<8x16xf32>, vector<8x16xf32> -> vector<8x16xf32>
    %c0_109 = arith.constant 0 : index
    %c0_110 = arith.constant 0 : index
    %244 = vector.load %arg22[%c0_109, %c0_110] : memref<16x32xf32, #tpu.memory_space<vmem>>, vector<8x16xf32>
    tpu.vector_store %arg22[%c0_109, %c0_110], %243 {strides = array<i32>} : memref<16x32xf32, #tpu.memory_space<vmem>>, vector<8x16xf32>,
    %245 = vector.extract_strided_slice %222 {offsets = [0, 16], sizes = [8, 16], strides = [1, 1]} : vector<8x96xf32> to vector<8x16xf32>
    %246 = vector.extract_strided_slice %222 {offsets = [0, 48], sizes = [8, 16], strides = [1, 1]} : vector<8x96xf32> to vector<8x16xf32>
    %247 = vector.extract_strided_slice %222 {offsets = [0, 80], sizes = [8, 16], strides = [1, 1]} : vector<8x96xf32> to vector<8x16xf32>
    %cst_111 = arith.constant dense<0.000000e+00> : vector<8x8xf32>
    %248 = tpu.matmul %245, %246, %cst_111 {dimension_numbers = #tpu.dot_dimension_numbers<[1], [1], [0], [0], [0, 0, 1, 0], [], []>} : vector<8x16xf32>, vector<8x16xf32>, vector<8x8xf32> -> vector<8x8xf32>
    %cst_112 = arith.constant 2.500000e-01 : f32
    %249 = vector.broadcast %cst_112 : f32 to vector<8x8xf32>
    %250 = arith.mulf %248, %249 : vector<8x8xf32>
    %251 = vector.broadcast %223 : vector<1x8xf32> to vector<8x8xf32>
    %252 = arith.addf %250, %251 : vector<8x8xf32>
    %cst_113 = arith.constant dense<0xFF800000> : vector<8xf32>
    %253 = vector.multi_reduction <maximumf>, %252, %cst_113 [1] : vector<8x8xf32> to vector<8xf32>
    %cst_114 = arith.constant 0xFF800000 : f32
    %254 = vector.broadcast %cst_114 : f32 to vector<8xf32>
    %255 = arith.maximumf %254, %253 : vector<8xf32>
    %256 = vector.shape_cast %255 : vector<8xf32> to vector<8x1xf32>
    %257 = vector.broadcast %256 : vector<8x1xf32> to vector<8x8xf32>
    %258 = arith.subf %252, %257 : vector<8x8xf32>
    %259 = math.exp %258 : vector<8x8xf32>
    %cst_115 = arith.constant dense<0.000000e+00> : vector<8xf32>
    %260 = vector.multi_reduction <add>, %259, %cst_115 [1] : vector<8x8xf32> to vector<8xf32>
    %261 = vector.shape_cast %260 : vector<8xf32> to vector<8x1xf32>
    %262 = vector.broadcast %261 : vector<8x1xf32> to vector<8x8xf32>
    %263 = arith.divf %259, %262 : vector<8x8xf32>
    %cst_116 = arith.constant dense<0.000000e+00> : vector<8x16xf32>
    %264 = tpu.matmul %263, %247, %cst_116 {dimension_numbers = #tpu.dot_dimension_numbers<[1], [0], [0], [1], [0, 0, 1, 1], [], []>} : vector<8x8xf32>, vector<8x16xf32>, vector<8x16xf32> -> vector<8x16xf32>
    %c0_117 = arith.constant 0 : index
    %c16_118 = arith.constant 16 : index
    %265 = vector.load %arg22[%c0_117, %c16_118] : memref<16x32xf32, #tpu.memory_space<vmem>>, vector<8x16xf32>
    tpu.vector_store %arg22[%c0_117, %c16_118], %264 {strides = array<i32>} : memref<16x32xf32, #tpu.memory_space<vmem>>, vector<8x16xf32>,
    %266 = vector.extract_strided_slice %221 {offsets = [8, 0], sizes = [8, 96], strides = [1, 1]} : vector<16x96xf32> to vector<8x96xf32>
    %267 = vector.extract_strided_slice %25 {offsets = [1, 0], sizes = [1, 8], strides = [1, 1]} : vector<2x8xf32> to vector<1x8xf32>
    %268 = vector.extract_strided_slice %266 {offsets = [0, 0], sizes = [8, 16], strides = [1, 1]} : vector<8x96xf32> to vector<8x16xf32>
    %269 = vector.extract_strided_slice %266 {offsets = [0, 32], sizes = [8, 16], strides = [1, 1]} : vector<8x96xf32> to vector<8x16xf32>
    %270 = vector.extract_strided_slice %266 {offsets = [0, 64], sizes = [8, 16], strides = [1, 1]} : vector<8x96xf32> to vector<8x16xf32>
    %cst_119 = arith.constant dense<0.000000e+00> : vector<8x8xf32>
    %271 = tpu.matmul %268, %269, %cst_119 {dimension_numbers = #tpu.dot_dimension_numbers<[1], [1], [0], [0], [0, 0, 1, 0], [], []>} : vector<8x16xf32>, vector<8x16xf32>, vector<8x8xf32> -> vector<8x8xf32>
    %cst_120 = arith.constant 2.500000e-01 : f32
    %272 = vector.broadcast %cst_120 : f32 to vector<8x8xf32>
    %273 = arith.mulf %271, %272 : vector<8x8xf32>
    %274 = vector.broadcast %267 : vector<1x8xf32> to vector<8x8xf32>
    %275 = arith.addf %273, %274 : vector<8x8xf32>
    %cst_121 = arith.constant dense<0xFF800000> : vector<8xf32>
    %276 = vector.multi_reduction <maximumf>, %275, %cst_121 [1] : vector<8x8xf32> to vector<8xf32>
    %cst_122 = arith.constant 0xFF800000 : f32
    %277 = vector.broadcast %cst_122 : f32 to vector<8xf32>
    %278 = arith.maximumf %277, %276 : vector<8xf32>
    %279 = vector.shape_cast %278 : vector<8xf32> to vector<8x1xf32>
    %280 = vector.broadcast %279 : vector<8x1xf32> to vector<8x8xf32>
    %281 = arith.subf %275, %280 : vector<8x8xf32>
    %282 = math.exp %281 : vector<8x8xf32>
    %cst_123 = arith.constant dense<0.000000e+00> : vector<8xf32>
    %283 = vector.multi_reduction <add>, %282, %cst_123 [1] : vector<8x8xf32> to vector<8xf32>
    %284 = vector.shape_cast %283 : vector<8xf32> to vector<8x1xf32>
    %285 = vector.broadcast %284 : vector<8x1xf32> to vector<8x8xf32>
    %286 = arith.divf %282, %285 : vector<8x8xf32>
    %cst_124 = arith.constant dense<0.000000e+00> : vector<8x16xf32>
    %287 = tpu.matmul %286, %270, %cst_124 {dimension_numbers = #tpu.dot_dimension_numbers<[1], [0], [0], [1], [0, 0, 1, 1], [], []>} : vector<8x8xf32>, vector<8x16xf32>, vector<8x16xf32> -> vector<8x16xf32>
    %c8_125 = arith.constant 8 : index
    %c0_126 = arith.constant 0 : index
    %288 = vector.load %arg22[%c8_125, %c0_126] : memref<16x32xf32, #tpu.memory_space<vmem>>, vector<8x16xf32>
    tpu.vector_store %arg22[%c8_125, %c0_126], %287 {strides = array<i32>} : memref<16x32xf32, #tpu.memory_space<vmem>>, vector<8x16xf32>,
    %289 = vector.extract_strided_slice %266 {offsets = [0, 16], sizes = [8, 16], strides = [1, 1]} : vector<8x96xf32> to vector<8x16xf32>
    %290 = vector.extract_strided_slice %266 {offsets = [0, 48], sizes = [8, 16], strides = [1, 1]} : vector<8x96xf32> to vector<8x16xf32>
    %291 = vector.extract_strided_slice %266 {offsets = [0, 80], sizes = [8, 16], strides = [1, 1]} : vector<8x96xf32> to vector<8x16xf32>
    %cst_127 = arith.constant dense<0.000000e+00> : vector<8x8xf32>
    %292 = tpu.matmul %289, %290, %cst_127 {dimension_numbers = #tpu.dot_dimension_numbers<[1], [1], [0], [0], [0, 0, 1, 0], [], []>} : vector<8x16xf32>, vector<8x16xf32>, vector<8x8xf32> -> vector<8x8xf32>
    %cst_128 = arith.constant 2.500000e-01 : f32
    %293 = vector.broadcast %cst_128 : f32 to vector<8x8xf32>
    %294 = arith.mulf %292, %293 : vector<8x8xf32>
    %295 = vector.broadcast %267 : vector<1x8xf32> to vector<8x8xf32>
    %296 = arith.addf %294, %295 : vector<8x8xf32>
    %cst_129 = arith.constant dense<0xFF800000> : vector<8xf32>
    %297 = vector.multi_reduction <maximumf>, %296, %cst_129 [1] : vector<8x8xf32> to vector<8xf32>
    %cst_130 = arith.constant 0xFF800000 : f32
    %298 = vector.broadcast %cst_130 : f32 to vector<8xf32>
    %299 = arith.maximumf %298, %297 : vector<8xf32>
    %300 = vector.shape_cast %299 : vector<8xf32> to vector<8x1xf32>
    %301 = vector.broadcast %300 : vector<8x1xf32> to vector<8x8xf32>
    %302 = arith.subf %296, %301 : vector<8x8xf32>
    %303 = math.exp %302 : vector<8x8xf32>
    %cst_131 = arith.constant dense<0.000000e+00> : vector<8xf32>
    %304 = vector.multi_reduction <add>, %303, %cst_131 [1] : vector<8x8xf32> to vector<8xf32>
    %305 = vector.shape_cast %304 : vector<8xf32> to vector<8x1xf32>
    %306 = vector.broadcast %305 : vector<8x1xf32> to vector<8x8xf32>
    %307 = arith.divf %303, %306 : vector<8x8xf32>
    %cst_132 = arith.constant dense<0.000000e+00> : vector<8x16xf32>
    %308 = tpu.matmul %307, %291, %cst_132 {dimension_numbers = #tpu.dot_dimension_numbers<[1], [0], [0], [1], [0, 0, 1, 1], [], []>} : vector<8x8xf32>, vector<8x16xf32>, vector<8x16xf32> -> vector<8x16xf32>
    %c8_133 = arith.constant 8 : index
    %c16_134 = arith.constant 16 : index
    %309 = vector.load %arg22[%c8_133, %c16_134] : memref<16x32xf32, #tpu.memory_space<vmem>>, vector<8x16xf32>
    tpu.vector_store %arg22[%c8_133, %c16_134], %308 {strides = array<i32>} : memref<16x32xf32, #tpu.memory_space<vmem>>, vector<8x16xf32>,
    %c0_135 = arith.constant 0 : index
    %c0_136 = arith.constant 0 : index
    %310 = vector.load %arg22[%c0_135, %c0_136] : memref<16x32xf32, #tpu.memory_space<vmem>>, vector<16x32xf32>
    %311 = arith.truncf %310 : vector<16x32xf32> to vector<16x32xbf16>
    %c1_137 = arith.constant 1 : index
    %c0_138 = arith.constant 0 : index
    %c0_139 = arith.constant 0 : index
    %312 = vector.load %arg7[%c1_137, %c0_138, %c0_139] : memref<2x32x32xbf16, #tpu.memory_space<vmem>>, vector<1x32x32xbf16>
    %313 = vector.shape_cast %312 : vector<1x32x32xbf16> to vector<32x32xbf16>
    %cst_140 = arith.constant dense<0.000000e+00> : vector<16x32xf32>
    %314 = tpu.matmul %311, %313, %cst_140 {dimension_numbers = #tpu.dot_dimension_numbers<[1], [0], [0], [1], [0, 0, 1, 1], [], []>} : vector<16x32xbf16>, vector<32x32xbf16>, vector<16x32xf32> -> vector<16x32xf32>
    %c1_141 = arith.constant 1 : index
    %c0_142 = arith.constant 0 : index
    %c0_143 = arith.constant 0 : index
    %315 = vector.load %arg8[%c1_141, %c0_142, %c0_143] : memref<2x1x32xf32, #tpu.memory_space<vmem>>, vector<1x1x32xf32>
    %316 = vector.shape_cast %315 : vector<1x1x32xf32> to vector<1x32xf32>
    %317 = vector.broadcast %316 : vector<1x32xf32> to vector<16x32xf32>
    %318 = arith.addf %314, %317 : vector<16x32xf32>
    %319 = arith.addf %213, %318 : vector<16x32xf32>
    %c1_144 = arith.constant 1 : index
    %c0_145 = arith.constant 0 : index
    %c0_146 = arith.constant 0 : index
    %320 = vector.load %arg9[%c1_144, %c0_145, %c0_146] : memref<2x1x32xf32, #tpu.memory_space<vmem>>, vector<1x1x32xf32>
    %321 = vector.shape_cast %320 : vector<1x1x32xf32> to vector<1x32xf32>
    %c1_147 = arith.constant 1 : index
    %c0_148 = arith.constant 0 : index
    %c0_149 = arith.constant 0 : index
    %322 = vector.load %arg10[%c1_147, %c0_148, %c0_149] : memref<2x1x32xf32, #tpu.memory_space<vmem>>, vector<1x1x32xf32>
    %323 = vector.shape_cast %322 : vector<1x1x32xf32> to vector<1x32xf32>
    %cst_150 = arith.constant dense<0.000000e+00> : vector<16xf32>
    %324 = vector.multi_reduction <add>, %319, %cst_150 [1] : vector<16x32xf32> to vector<16xf32>
    %325 = vector.shape_cast %324 : vector<16xf32> to vector<16x1xf32>
    %cst_151 = arith.constant 3.200000e+01 : f32
    %326 = vector.broadcast %cst_151 : f32 to vector<16x1xf32>
    %327 = arith.divf %325, %326 : vector<16x1xf32>
    %328 = vector.broadcast %327 : vector<16x1xf32> to vector<16x32xf32>
    %329 = arith.subf %319, %328 : vector<16x32xf32>
    %330 = arith.mulf %329, %329 : vector<16x32xf32>
    %cst_152 = arith.constant dense<0.000000e+00> : vector<16xf32>
    %331 = vector.multi_reduction <add>, %330, %cst_152 [1] : vector<16x32xf32> to vector<16xf32>
    %332 = vector.shape_cast %331 : vector<16xf32> to vector<16x1xf32>
    %cst_153 = arith.constant 3.200000e+01 : f32
    %333 = vector.broadcast %cst_153 : f32 to vector<16x1xf32>
    %334 = arith.divf %332, %333 : vector<16x1xf32>
    %335 = vector.broadcast %327 : vector<16x1xf32> to vector<16x32xf32>
    %336 = arith.subf %319, %335 : vector<16x32xf32>
    %cst_154 = arith.constant 9.99999996E-13 : f32
    %337 = vector.broadcast %cst_154 : f32 to vector<16x1xf32>
    %338 = arith.addf %334, %337 : vector<16x1xf32>
    %339 = math.rsqrt %338 : vector<16x1xf32>
    %340 = vector.broadcast %339 : vector<16x1xf32> to vector<16x32xf32>
    %341 = arith.mulf %336, %340 : vector<16x32xf32>
    %342 = vector.broadcast %321 : vector<1x32xf32> to vector<16x32xf32>
    %343 = arith.mulf %341, %342 : vector<16x32xf32>
    %344 = vector.broadcast %323 : vector<1x32xf32> to vector<16x32xf32>
    %345 = arith.addf %343, %344 : vector<16x32xf32>
    %346 = arith.truncf %345 : vector<16x32xf32> to vector<16x32xbf16>
    %c1_155 = arith.constant 1 : index
    %c0_156 = arith.constant 0 : index
    %c0_157 = arith.constant 0 : index
    %347 = vector.load %arg11[%c1_155, %c0_156, %c0_157] : memref<2x32x64xbf16, #tpu.memory_space<vmem>>, vector<1x32x64xbf16>
    %348 = vector.shape_cast %347 : vector<1x32x64xbf16> to vector<32x64xbf16>
    %cst_158 = arith.constant dense<0.000000e+00> : vector<16x64xf32>
    %349 = tpu.matmul %346, %348, %cst_158 {dimension_numbers = #tpu.dot_dimension_numbers<[1], [0], [0], [1], [0, 0, 1, 1], [], []>} : vector<16x32xbf16>, vector<32x64xbf16>, vector<16x64xf32> -> vector<16x64xf32>
    %c1_159 = arith.constant 1 : index
    %c0_160 = arith.constant 0 : index
    %c0_161 = arith.constant 0 : index
    %350 = vector.load %arg12[%c1_159, %c0_160, %c0_161] : memref<2x1x64xf32, #tpu.memory_space<vmem>>, vector<1x1x64xf32>
    %351 = vector.shape_cast %350 : vector<1x1x64xf32> to vector<1x64xf32>
    %352 = vector.broadcast %351 : vector<1x64xf32> to vector<16x64xf32>
    %353 = arith.addf %349, %352 : vector<16x64xf32>
    %354 = arith.mulf %353, %353 : vector<16x64xf32>
    %355 = arith.mulf %353, %354 : vector<16x64xf32>
    %cst_162 = arith.constant 4.471500e-02 : f32
    %356 = vector.broadcast %cst_162 : f32 to vector<16x64xf32>
    %357 = arith.mulf %356, %355 : vector<16x64xf32>
    %358 = arith.addf %353, %357 : vector<16x64xf32>
    %cst_163 = arith.constant 0.797884583 : f32
    %359 = vector.broadcast %cst_163 : f32 to vector<16x64xf32>
    %360 = arith.mulf %359, %358 : vector<16x64xf32>
    %361 = math.tanh %360 : vector<16x64xf32>
    %cst_164 = arith.constant 1.000000e+00 : f32
    %362 = vector.broadcast %cst_164 : f32 to vector<16x64xf32>
    %363 = arith.addf %362, %361 : vector<16x64xf32>
    %cst_165 = arith.constant 5.000000e-01 : f32
    %364 = vector.broadcast %cst_165 : f32 to vector<16x64xf32>
    %365 = arith.mulf %364, %363 : vector<16x64xf32>
    %366 = arith.mulf %353, %365 : vector<16x64xf32>
    %367 = arith.truncf %366 : vector<16x64xf32> to vector<16x64xbf16>
    %c1_166 = arith.constant 1 : index
    %c0_167 = arith.constant 0 : index
    %c0_168 = arith.constant 0 : index
    %368 = vector.load %arg13[%c1_166, %c0_167, %c0_168] : memref<2x64x32xbf16, #tpu.memory_space<vmem>>, vector<1x64x32xbf16>
    %369 = vector.shape_cast %368 : vector<1x64x32xbf16> to vector<64x32xbf16>
    %cst_169 = arith.constant dense<0.000000e+00> : vector<16x32xf32>
    %370 = tpu.matmul %367, %369, %cst_169 {dimension_numbers = #tpu.dot_dimension_numbers<[1], [0], [0], [1], [0, 0, 1, 1], [], []>} : vector<16x64xbf16>, vector<64x32xbf16>, vector<16x32xf32> -> vector<16x32xf32>
    %c1_170 = arith.constant 1 : index
    %c0_171 = arith.constant 0 : index
    %c0_172 = arith.constant 0 : index
    %371 = vector.load %arg14[%c1_170, %c0_171, %c0_172] : memref<2x1x32xf32, #tpu.memory_space<vmem>>, vector<1x1x32xf32>
    %372 = vector.shape_cast %371 : vector<1x1x32xf32> to vector<1x32xf32>
    %373 = vector.broadcast %372 : vector<1x32xf32> to vector<16x32xf32>
    %374 = arith.addf %370, %373 : vector<16x32xf32>
    %375 = arith.addf %345, %374 : vector<16x32xf32>
    %c1_173 = arith.constant 1 : index
    %c0_174 = arith.constant 0 : index
    %c0_175 = arith.constant 0 : index
    %376 = vector.load %arg15[%c1_173, %c0_174, %c0_175] : memref<2x1x32xf32, #tpu.memory_space<vmem>>, vector<1x1x32xf32>
    %377 = vector.shape_cast %376 : vector<1x1x32xf32> to vector<1x32xf32>
    %c1_176 = arith.constant 1 : index
    %c0_177 = arith.constant 0 : index
    %c0_178 = arith.constant 0 : index
    %378 = vector.load %arg16[%c1_176, %c0_177, %c0_178] : memref<2x1x32xf32, #tpu.memory_space<vmem>>, vector<1x1x32xf32>
    %379 = vector.shape_cast %378 : vector<1x1x32xf32> to vector<1x32xf32>
    %cst_179 = arith.constant dense<0.000000e+00> : vector<16xf32>
    %380 = vector.multi_reduction <add>, %375, %cst_179 [1] : vector<16x32xf32> to vector<16xf32>
    %381 = vector.shape_cast %380 : vector<16xf32> to vector<16x1xf32>
    %cst_180 = arith.constant 3.200000e+01 : f32
    %382 = vector.broadcast %cst_180 : f32 to vector<16x1xf32>
    %383 = arith.divf %381, %382 : vector<16x1xf32>
    %384 = vector.broadcast %383 : vector<16x1xf32> to vector<16x32xf32>
    %385 = arith.subf %375, %384 : vector<16x32xf32>
    %386 = arith.mulf %385, %385 : vector<16x32xf32>
    %cst_181 = arith.constant dense<0.000000e+00> : vector<16xf32>
    %387 = vector.multi_reduction <add>, %386, %cst_181 [1] : vector<16x32xf32> to vector<16xf32>
    %388 = vector.shape_cast %387 : vector<16xf32> to vector<16x1xf32>
    %cst_182 = arith.constant 3.200000e+01 : f32
    %389 = vector.broadcast %cst_182 : f32 to vector<16x1xf32>
    %390 = arith.divf %388, %389 : vector<16x1xf32>
    %391 = vector.broadcast %383 : vector<16x1xf32> to vector<16x32xf32>
    %392 = arith.subf %375, %391 : vector<16x32xf32>
    %cst_183 = arith.constant 9.99999996E-13 : f32
    %393 = vector.broadcast %cst_183 : f32 to vector<16x1xf32>
    %394 = arith.addf %390, %393 : vector<16x1xf32>
    %395 = math.rsqrt %394 : vector<16x1xf32>
    %396 = vector.broadcast %395 : vector<16x1xf32> to vector<16x32xf32>
    %397 = arith.mulf %392, %396 : vector<16x32xf32>
    %398 = vector.broadcast %377 : vector<1x32xf32> to vector<16x32xf32>
    %399 = arith.mulf %397, %398 : vector<16x32xf32>
    %400 = vector.broadcast %379 : vector<1x32xf32> to vector<16x32xf32>
    %401 = arith.addf %399, %400 : vector<16x32xf32>
    %402 = vector.extract_strided_slice %401 {offsets = [0, 0], sizes = [1, 32], strides = [1, 1]} : vector<16x32xf32> to vector<1x32xf32>
    %403 = vector.extract_strided_slice %401 {offsets = [8, 0], sizes = [1, 32], strides = [1, 1]} : vector<16x32xf32> to vector<1x32xf32>
    %404 = tpu.concatenate %402, %403 in 0 : vector<1x32xf32>, vector<1x32xf32> -> vector<2x32xf32>
    %405 = arith.truncf %404 : vector<2x32xf32> to vector<2x32xbf16>
    %c0_184 = arith.constant 0 : index
    %c0_185 = arith.constant 0 : index
    %406 = vector.load %arg17[%c0_184, %c0_185] : memref<32x32xbf16, #tpu.memory_space<vmem>>, vector<32x32xbf16>
    %cst_186 = arith.constant dense<0.000000e+00> : vector<2x32xf32>
    %407 = tpu.matmul %405, %406, %cst_186 {dimension_numbers = #tpu.dot_dimension_numbers<[1], [0], [0], [1], [0, 0, 1, 1], [], []>} : vector<2x32xbf16>, vector<32x32xbf16>, vector<2x32xf32> -> vector<2x32xf32>
    %c0_187 = arith.constant 0 : index
    %c0_188 = arith.constant 0 : index
    %408 = vector.load %arg18[%c0_187, %c0_188] : memref<1x32xf32, #tpu.memory_space<vmem>>, vector<1x32xf32>
    %409 = vector.broadcast %408 : vector<1x32xf32> to vector<2x32xf32>
    %410 = arith.addf %407, %409 : vector<2x32xf32>
    %411 = math.tanh %410 : vector<2x32xf32>
    %c0_189 = arith.constant 0 : index
    %c0_190 = arith.constant 0 : index
    %412 = vector.load %arg2[%c0_189, %c0_190] : memref<2x32xf32, #tpu.memory_space<vmem>>, vector<2x32xf32>
    %413 = arith.mulf %411, %412 : vector<2x32xf32>
    %414 = arith.truncf %413 : vector<2x32xf32> to vector<2x32xbf16>
    %c0_191 = arith.constant 0 : index
    %c0_192 = arith.constant 0 : index
    %415 = vector.load %arg19[%c0_191, %c0_192] : memref<32x128xbf16, #tpu.memory_space<vmem>>, vector<32x128xbf16>
    %cst_193 = arith.constant dense<0.000000e+00> : vector<2x128xf32>
    %416 = tpu.matmul %414, %415, %cst_193 {dimension_numbers = #tpu.dot_dimension_numbers<[1], [0], [0], [1], [0, 0, 1, 1], [], []>} : vector<2x32xbf16>, vector<32x128xbf16>, vector<2x128xf32> -> vector<2x128xf32>
    %c0_194 = arith.constant 0 : index
    %c0_195 = arith.constant 0 : index
    %417 = vector.load %arg20[%c0_194, %c0_195] : memref<1x128xf32, #tpu.memory_space<vmem>>, vector<1x128xf32>
    %418 = vector.broadcast %417 : vector<1x128xf32> to vector<2x128xf32>
    %419 = arith.addf %416, %418 : vector<2x128xf32>
    %c0_196 = arith.constant 0 : index
    %c0_197 = arith.constant 0 : index
    %420 = vector.load %arg21[%c0_196, %c0_197] : memref<2x128xf32, #tpu.memory_space<vmem>>, vector<2x128xf32>
    tpu.vector_store %arg21[%c0_196, %c0_197], %419 {strides = array<i32>} : memref<2x128xf32, #tpu.memory_space<vmem>>, vector<2x128xf32>,
    return
  }
}

</mosaic_0001>

<llo_original>
// kernel: emotion_classifier_forward.1
$region0: #{emotion_classifier_forward.1}
  #allocation0 [shape = 'u32[]', space=smem, size = 0x4, offset = 0x4, fixed_abs, tag = 'smem constant byte address 0x4 - core index']
  #allocation1 [shape = 'u32[72,128]{1,0:T(1,128)}', space=vmem, size = 0x9000, scoped, tag = 'internal scratch']
  #allocation2 [shape = 'f32[16,32]{1,0:T(8,128)}', space=vmem, size = 0x2000, scoped, tag = 'scratch operand']
  %s0 = inlined_call_operand.vmem [shape: f32[16,32], index: 0, kind: input, shape index: {}]
  %s1 = inlined_call_operand.vmem [shape: f32[2,8], index: 1, kind: input, shape index: {}]
  %s2 = inlined_call_operand.vmem [shape: f32[2,32], index: 2, kind: input, shape index: {}]
  %s3 = inlined_call_operand.vmem [shape: f32[1,32], index: 3, kind: input, shape index: {}]
  %s4 = inlined_call_operand.vmem [shape: f32[1,32], index: 4, kind: input, shape index: {}]
  %s5 = inlined_call_operand.vmem [shape: bf16[2,32,96], index: 5, kind: input, shape index: {}]
  %s6 = inlined_call_operand.vmem [shape: f32[2,1,96], index: 6, kind: input, shape index: {}]
  %s7 = inlined_call_operand.vmem [shape: bf16[2,32,32], index: 7, kind: input, shape index: {}]
  %s8 = inlined_call_operand.vmem [shape: f32[2,1,32], index: 8, kind: input, shape index: {}]
  %s9 = inlined_call_operand.vmem [shape: f32[2,1,32], index: 9, kind: input, shape index: {}]
  %s10 = inlined_call_operand.vmem [shape: f32[2,1,32], index: 10, kind: input, shape index: {}]
  %s11 = inlined_call_operand.vmem [shape: bf16[2,32,64], index: 11, kind: input, shape index: {}]
  %s12 = inlined_call_operand.vmem [shape: f32[2,1,64], index: 12, kind: input, shape index: {}]
  %s13 = inlined_call_operand.vmem [shape: bf16[2,64,32], index: 13, kind: input, shape index: {}]
  %s14 = inlined_call_operand.vmem [shape: f32[2,1,32], index: 14, kind: input, shape index: {}]
  %s15 = inlined_call_operand.vmem [shape: f32[2,1,32], index: 15, kind: input, shape index: {}]
  %s16 = inlined_call_operand.vmem [shape: f32[2,1,32], index: 16, kind: input, shape index: {}]
  %s17 = inlined_call_operand.vmem [shape: bf16[32,32], index: 17, kind: input, shape index: {}]
  %s18 = inlined_call_operand.vmem [shape: f32[1,32], index: 18, kind: input, shape index: {}]
  %s19 = inlined_call_operand.vmem [shape: bf16[32,128], index: 19, kind: input, shape index: {}]
  %s20 = inlined_call_operand.vmem [shape: f32[1,128], index: 20, kind: input, shape index: {}]
  %s21 = inlined_call_operand.hbm [shape: f32[2,128], index: 21, kind: output, shape index: {}]
  %s22 = sld [smem:[#allocation0]]
  $region94: #{emotion_classifier_forward.1} parent=0
    _
  %s24 = ssub.s32 1, %s22
  %s25 = scalar_select 0, %s24, %s22
  $region1: #{emotion_classifier_forward.1} parent=0
    #allocation3 [shape = 'u8[1024]{0}', space=vmem, size = 0x400, scoped, tag = 'output window, operand 0, single buffered']
    #allocation4 [shape = 's32[1]{0}', space=sflag, size = 0x4, scoped, tag = 'scoped memory for emotion_classifier_forward.1']
    %26 = vsyncpa [#allocation4], 0
    // Predicated region
    $region2: #{emotion_classifier_forward.1} parent=1 // pred_check
      _
    $region3: #{emotion_classifier_forward.1} parent=1 // pred_check_branch
      %28 = sbr.rel (0) target = $region5
    $region4: #{emotion_classifier_forward.1} parent=1 // pred_region
      _
    $region5: #{emotion_classifier_forward.1} parent=1 // pred_fallthru
      _
    // Predicated region
    $region6: #{emotion_classifier_forward.1} parent=1 // pred_check
      _
    $region7: #{emotion_classifier_forward.1} parent=1 // pred_check_branch
      %30 = sbr.rel (0) target = $region9
    $region8: #{emotion_classifier_forward.1} parent=1 // pred_region
      _
    $region9: #{emotion_classifier_forward.1} parent=1 // pred_fallthru
      _
    // Predicated region
    $region10: #{emotion_classifier_forward.1} parent=1 // pred_check
      _
    $region11: #{emotion_classifier_forward.1} parent=1 // pred_check_branch
      %32 = sbr.rel (0) target = $region13
    $region12: #{emotion_classifier_forward.1} parent=1 // pred_region
      _
    $region13: #{emotion_classifier_forward.1} parent=1 // pred_fallthru
      _
    // Predicated region
    $region14: #{emotion_classifier_forward.1} parent=1 // pred_check
      _
    $region15: #{emotion_classifier_forward.1} parent=1 // pred_check_branch
      %34 = sbr.rel (0) target = $region17
    $region16: #{emotion_classifier_forward.1} parent=1 // pred_region
      _
    $region17: #{emotion_classifier_forward.1} parent=1 // pred_fallthru
      _
    // Predicated region
    $region18: #{emotion_classifier_forward.1} parent=1 // pred_check
      _
    $region19: #{emotion_classifier_forward.1} parent=1 // pred_check_branch
      %36 = sbr.rel (0) target = $region21
    $region20: #{emotion_classifier_forward.1} parent=1 // pred_region
      _
    $region21: #{emotion_classifier_forward.1} parent=1 // pred_fallthru
      _
    // Predicated region
    $region22: #{emotion_classifier_forward.1} parent=1 // pred_check
      _
    $region23: #{emotion_classifier_forward.1} parent=1 // pred_check_branch
      %38 = sbr.rel (0) target = $region25
    $region24: #{emotion_classifier_forward.1} parent=1 // pred_region
      _
    $region25: #{emotion_classifier_forward.1} parent=1 // pred_fallthru
      _
    // Predicated region
    $region26: #{emotion_classifier_forward.1} parent=1 // pred_check
      _
    $region27: #{emotion_classifier_forward.1} parent=1 // pred_check_branch
      %40 = sbr.rel (0) target = $region29
    $region28: #{emotion_classifier_forward.1} parent=1 // pred_region
      _
    $region29: #{emotion_classifier_forward.1} parent=1 // pred_fallthru
      _
    // Predicated region
    $region30: #{emotion_classifier_forward.1} parent=1 // pred_check
      _
    $region31: #{emotion_classifier_forward.1} parent=1 // pred_check_branch
      %42 = sbr.rel (0) target = $region33
    $region32: #{emotion_classifier_forward.1} parent=1 // pred_region
      _
    $region33: #{emotion_classifier_forward.1} parent=1 // pred_fallthru
      _
    // Predicated region
    $region34: #{emotion_classifier_forward.1} parent=1 // pred_check
      _
    $region35: #{emotion_classifier_forward.1} parent=1 // pred_check_branch
      %44 = sbr.rel (0) target = $region37
    $region36: #{emotion_classifier_forward.1} parent=1 // pred_region
      _
    $region37: #{emotion_classifier_forward.1} parent=1 // pred_fallthru
      _
    // Predicated region
    $region38: #{emotion_classifier_forward.1} parent=1 // pred_check
      _
    $region39: #{emotion_classifier_forward.1} parent=1 // pred_check_branch
      %46 = sbr.rel (0) target = $region41
    $region40: #{emotion_classifier_forward.1} parent=1 // pred_region
      _
    $region41: #{emotion_classifier_forward.1} parent=1 // pred_fallthru
      _
    // Predicated region
    $region42: #{emotion_classifier_forward.1} parent=1 // pred_check
      _
    $region43: #{emotion_classifier_forward.1} parent=1 // pred_check_branch
      %48 = sbr.rel (0) target = $region45
    $region44: #{emotion_classifier_forward.1} parent=1 // pred_region
      _
    $region45: #{emotion_classifier_forward.1} parent=1 // pred_fallthru
      _
    // Predicated region
    $region46: #{emotion_classifier_forward.1} parent=1 // pred_check
      _
    $region47: #{emotion_classifier_forward.1} parent=1 // pred_check_branch
      %50 = sbr.rel (0) target = $region49
    $region48: #{emotion_classifier_forward.1} parent=1 // pred_region
      _
    $region49: #{emotion_classifier_forward.1} parent=1 // pred_fallthru
      _
    // Predicated region
    $region50: #{emotion_classifier_forward.1} parent=1 // pred_check
      _
    $region51: #{emotion_classifier_forward.1} parent=1 // pred_check_branch
      %52 = sbr.rel (0) target = $region53
    $region52: #{emotion_classifier_forward.1} parent=1 // pred_region
      _
    $region53: #{emotion_classifier_forward.1} parent=1 // pred_fallthru
      _
    // Predicated region
    $region54: #{emotion_classifier_forward.1} parent=1 // pred_check
      _
    $region55: #{emotion_classifier_forward.1} parent=1 // pred_check_branch
      %54 = sbr.rel (0) target = $region57
    $region56: #{emotion_classifier_forward.1} parent=1 // pred_region
      _
    $region57: #{emotion_classifier_forward.1} parent=1 // pred_fallthru
      _
    // Predicated region
    $region58: #{emotion_classifier_forward.1} parent=1 // pred_check
      _
    $region59: #{emotion_classifier_forward.1} parent=1 // pred_check_branch
      %56 = sbr.rel (0) target = $region61
    $region60: #{emotion_classifier_forward.1} parent=1 // pred_region
      _
    $region61: #{emotion_classifier_forward.1} parent=1 // pred_fallthru
      _
    // Predicated region
    $region62: #{emotion_classifier_forward.1} parent=1 // pred_check
      _
    $region63: #{emotion_classifier_forward.1} parent=1 // pred_check_branch
      %58 = sbr.rel (0) target = $region65
    $region64: #{emotion_classifier_forward.1} parent=1 // pred_region
      _
    $region65: #{emotion_classifier_forward.1} parent=1 // pred_fallthru
      _
    // Predicated region
    $region66: #{emotion_classifier_forward.1} parent=1 // pred_check
      _
    $region67: #{emotion_classifier_forward.1} parent=1 // pred_check_branch
      %60 = sbr.rel (0) target = $region69
    $region68: #{emotion_classifier_forward.1} parent=1 // pred_region
      _
    $region69: #{emotion_classifier_forward.1} parent=1 // pred_fallthru
      _
    // Predicated region
    $region70: #{emotion_classifier_forward.1} parent=1 // pred_check
      _
    $region71: #{emotion_classifier_forward.1} parent=1 // pred_check_branch
      %62 = sbr.rel (0) target = $region73
    $region72: #{emotion_classifier_forward.1} parent=1 // pred_region
      _
    $region73: #{emotion_classifier_forward.1} parent=1 // pred_fallthru
      _
    // Predicated region
    $region74: #{emotion_classifier_forward.1} parent=1 // pred_check
      _
    $region75: #{emotion_classifier_forward.1} parent=1 // pred_check_branch
      %64 = sbr.rel (0) target = $region77
    $region76: #{emotion_classifier_forward.1} parent=1 // pred_region
      _
    $region77: #{emotion_classifier_forward.1} parent=1 // pred_fallthru
      _
    // Predicated region
    $region78: #{emotion_classifier_forward.1} parent=1 // pred_check
      _
    $region79: #{emotion_classifier_forward.1} parent=1 // pred_check_branch
      %66 = sbr.rel (0) target = $region81
    $region80: #{emotion_classifier_forward.1} parent=1 // pred_region
      _
    $region81: #{emotion_classifier_forward.1} parent=1 // pred_fallthru
      _
    // Predicated region
    $region82: #{emotion_classifier_forward.1} parent=1 // pred_check
      _
    $region83: #{emotion_classifier_forward.1} parent=1 // pred_check_branch
      %68 = sbr.rel (0) target = $region85
    $region84: #{emotion_classifier_forward.1} parent=1 // pred_region
      _
    $region85: #{emotion_classifier_forward.1} parent=1 // pred_fallthru
      _
    %v70 = vld [vmem:[%s0] sm:$0xff]
    %v71 = vld [vmem:[%s0 + $0x8] sm:$0xff]
    %v72 = vld [vmem:[%s3] sm:$0x1]
    %v73 = vld [vmem:[%s4] sm:$0x1]
    %vm74 = vcmask 261120
    %v75 = vsel %vm74, %v70, 0.0
    %76 = vadd.xlane.f32.xlu0 %v75
    %v77 = vpop.xlane.xlu0 %76
    %v78 = vsel %vm74, %v71, 0.0
    %79 = vadd.xlane.f32.xlu0 %v78
    %v80 = vpop.xlane.xlu0 %79
    %v81 = vrcp.pop 32.0
    %v82 = vmul.f32 32.0, %v81
    %v83 = vsub.f32 1.0, %v82
    %v84 = vmul.f32 %v81, %v83
    %v85 = vadd.f32 %v81, %v84
    %vm86 = vweird.f32 %v81
    %v87 = vsel %vm86, %v81, %v85
    %v88 = vmul.f32 %v77, %v87
    %v89 = vmul.f32 %v80, %v87
    %v90 = vsub.f32 %v70, %v88
    %v91 = vsub.f32 %v71, %v89
    %v92 = vmul.f32 %v90, %v90
    %v93 = vmul.f32 %v91, %v91
    %v94 = vsel %vm74, %v92, 0.0
    %95 = vadd.xlane.f32.xlu0 %v94
    %v96 = vpop.xlane.xlu0 %95
    %v97 = vsel %vm74, %v93, 0.0
    %98 = vadd.xlane.f32.xlu0 %v97
    %v99 = vpop.xlane.xlu0 %98
    %v100 = vmul.f32 %v96, %v87
    %v101 = vmul.f32 %v99, %v87
    %v102 = vadd.f32 %v100, 1e-12
    %v103 = vadd.f32 %v101, 1e-12
    %v104 = vrsqrt.pop %v102
    %v105 = vmul.f32 %v104, %v102
    %v106 = vmul.f32 %v105, %v104
    %v107 = vmul.f32 0.5, %v106
    %v108 = vsub.f32 1.5, %v107
    %v109 = vmul.f32 %v104, %v108
    %vm110 = vweird.f32 %v102
    %vm111 = vweird.f32 %v104
    %vm112 = vmor %vm110, %vm111
    %v113 = vsel %vm112, %v104, %v109
    %v114 = vrsqrt.pop %v103
    %v115 = vmul.f32 %v114, %v103
    %v116 = vmul.f32 %v115, %v114
    %v117 = vmul.f32 0.5, %v116
    %v118 = vsub.f32 1.5, %v117
    %v119 = vmul.f32 %v114, %v118
    %vm120 = vweird.f32 %v103
    %vm121 = vweird.f32 %v114
    %vm122 = vmor %vm120, %vm121
    %v123 = vsel %vm122, %v114, %v119
    %v124 = vmul.f32 %v90, %v113
    %v125 = vmul.f32 %v91, %v123
    %v127 = vperm.slane %v72, 0
    %v129 = vmul.f32 %v124, %v127
    %v130 = vmul.f32 %v125, %v127
    %v132 = vperm.slane %v73, 0
    %v134 = vadd.f32 %v129, %v132
    %v135 = vadd.f32 %v130, %v132
    %v136 = vld [vmem:[%s1] sm:$0x3]
    %v137 = vpack.c.bf16 %v135, %v134
    %v138 = vld [vmem:[%s5] sm:$0xf]
    %v139 = vld [vmem:[%s5 + $0x4] sm:$0xf]
    %v140 = vld [vmem:[%s5 + $0x8] sm:$0xf]
    %v141 = vld [vmem:[%s5 + $0xc] sm:$0xf]
    %v142 = vld [vmem:[%s6] sm:$0x1]
    %v144 = vperm.slane %v142, 0
    %v150 = vunpack.c.l.b16 %v138
    %v151 = vunpack.c.l.b16 %v139
    %v152 = vunpack.c.l.b16 %v140
    %v153 = vunpack.c.l.b16 %v141
    %v154 = vpack.c.b16 %v151, %v150
    %v155 = vpack.c.b16 %v153, %v152
    %v159 = vsel %vm74, %v137, 0
    %161 = vmatpush.bf16.msra.mxu0 0
    %162 = vmatpush.bf16.msra.mxu0 0
    %163 = vmatpush.bf16.msra.mxu0 0
    %164 = vmatpush.bf16.msra.mxu0 0
    %165 = vmatpush.bf16.msra.mxu0 0
    %166 = vmatpush.bf16.msra.mxu0 0
    %167 = vmatpush.bf16.msra.mxu0 %v155
    %168 = vmatpush.bf16.msra.mxu0 %v154
    %169 = vmatmul.bf16.gmra.mxu0 %v159
    %v170 = vpop.f32.mrf.mxu0
    %v171 = vadd.f32 %v144, %v170
    %v172 = vpop.f32.mrf.mxu0
    %v173 = vadd.f32 %v144, %v172
    %174 = vdwg.mxu0
    %176 = vrot.lane.b32.xlu0 %v171, 96
    %v177 = vpop.permute.xlu0 %176
    %vm178 = vcmask 130048
    %v179 = vsel %vm178, %v171, 0
    %v181 = vsel %vm178, %v177, 0
    %183 = vmatpush.xpose.msra.mxu0 0.0
    %184 = vmatpush.xpose.msra.mxu0 0.0
    %185 = vmatpush.xpose.msra.mxu0 0.0
    %186 = vmatpush.xpose.msra.mxu0 0.0
    %187 = vmatpush.xpose.msra.mxu0 0.0
    %188 = vmatpush.xpose.msra.mxu0 0.0
    %189 = vmatpush.xpose.msra.mxu0 0.0
    %190 = vmatpush.xpose.msra.mxu0 0.0
    %191 = vmatpush.xpose.msra.mxu0 0.0
    %192 = vmatpush.xpose.msra.mxu0 0.0
    %193 = vmatpush.xpose.msra.mxu0 0.0
    %194 = vmatpush.xpose.msra.mxu0 0.0
    %195 = vmatpush.xpose.msra.mxu0 0.0
    %196 = vmatpush.xpose.msra.mxu0 0.0
    %197 = vmatpush.xpose.msra.mxu0 0.0
    %198 = vmatpush.xpose.msra.mxu0 %v181
    %199 = vmatmul.f32.gmra.mxu0 %v179
    %v200 = vpop.f32.mrf.mxu0
    %v201 = vadd.f32 0.0, %v200
    %202 = vdwg.mxu0
    %v203 = vmul.f32 %v201, 0.25
    %v204 = vperm.slane %v136, 0
    %v205 = vadd.f32 %v203, %v204
    %vm206 = vcmask 64512
    %v207 = vsel %vm206, %v205, -inf
    %208 = vmax.xlane.f32.xlu0 %v207
    %v209 = vpop.xlane.xlu0 %208
    %v210 = vsub.f32 %v205, %v209
    %v211 = vmul.f32 %v210, 1.442695
    %v212 = vpow.pop %v211
    %v213 = vsel %vm206, %v212, 0.0
    %214 = vadd.xlane.f32.xlu0 %v213
    %v215 = vpop.xlane.xlu0 %214
    %v216 = vrcp.pop %v215
    %v217 = vmul.f32 %v215, %v216
    %v218 = vsub.f32 1.0, %v217
    %v219 = vmul.f32 %v216, %v218
    %v220 = vadd.f32 %v216, %v219
    %vm221 = vweird.f32 %v215
    %vm222 = vweird.f32 %v216
    %vm223 = vmor %vm221, %vm222
    %v224 = vsel %vm223, %v216, %v220
    %v225 = vand.u32 2147483647, %v215
    %vm226 = vcmp.eq.f32.partialorder %v225, 8.507059e+37
    %v227 = vand.u32 %v215, 2147483648
    %v228 = vor.u32 1.1754944e-38, %v227
    %v229 = vsel %vm226, %v228, %v224
    %v230 = vmul.f32 %v212, %v229
    %231 = vrot.lane.b32.xlu0 %v171, 64
    %v232 = vpop.permute.xlu0 %231
    %v235 = vsel %vm206, %v230, 0
    %237 = vmatpush.msra.mxu0 0.0
    %238 = vmatpush.msra.mxu0 0.0
    %239 = vmatpush.msra.mxu0 0.0
    %240 = vmatpush.msra.mxu0 0.0
    %241 = vmatpush.msra.mxu0 0.0
    %242 = vmatpush.msra.mxu0 0.0
    %243 = vmatpush.msra.mxu0 0.0
    %244 = vmatpush.msra.mxu0 0.0
    %245 = vmatpush.msra.mxu0 0.0
    %246 = vmatpush.msra.mxu0 0.0
    %247 = vmatpush.msra.mxu0 0.0
    %248 = vmatpush.msra.mxu0 0.0
    %249 = vmatpush.msra.mxu0 0.0
    %250 = vmatpush.msra.mxu0 0.0
    %251 = vmatpush.msra.mxu0 0.0
    %252 = vmatpush.msra.mxu0 %v232
    %253 = vmatmul.f32.gmra.mxu0 %v235
    %v254 = vpop.f32.mrf.mxu0
    %v255 = vadd.f32 0.0, %v254
    %256 = vdwg.mxu0
    %257 = vst.msk [vmem:[#allocation2] sm:$0xff] %vm178, %v255
    %258 = vrot.lane.b32.xlu0 %v171, 112
    %v259 = vpop.permute.xlu0 %258
    %260 = vrot.lane.b32.xlu0 %v171, 80
    %v261 = vpop.permute.xlu0 %260
    %v262 = vsel %vm178, %v259, 0
    %v264 = vsel %vm178, %v261, 0
    %266 = vmatpush.xpose.msra.mxu0 0.0
    %267 = vmatpush.xpose.msra.mxu0 0.0
    %268 = vmatpush.xpose.msra.mxu0 0.0
    %269 = vmatpush.xpose.msra.mxu0 0.0
    %270 = vmatpush.xpose.msra.mxu0 0.0
    %271 = vmatpush.xpose.msra.mxu0 0.0
    %272 = vmatpush.xpose.msra.mxu0 0.0
    %273 = vmatpush.xpose.msra.mxu0 0.0
    %274 = vmatpush.xpose.msra.mxu0 0.0
    %275 = vmatpush.xpose.msra.mxu0 0.0
    %276 = vmatpush.xpose.msra.mxu0 0.0
    %277 = vmatpush.xpose.msra.mxu0 0.0
    %278 = vmatpush.xpose.msra.mxu0 0.0
    %279 = vmatpush.xpose.msra.mxu0 0.0
    %280 = vmatpush.xpose.msra.mxu0 0.0
    %281 = vmatpush.xpose.msra.mxu0 %v264
    %282 = vmatmul.f32.gmra.mxu0 %v262
    %v283 = vpop.f32.mrf.mxu0
    %v284 = vadd.f32 0.0, %v283
    %285 = vdwg.mxu0
    %v286 = vmul.f32 %v284, 0.25
    %v287 = vadd.f32 %v286, %v204
    %v288 = vsel %vm206, %v287, -inf
    %289 = vmax.xlane.f32.xlu0 %v288
    %v290 = vpop.xlane.xlu0 %289
    %v291 = vsub.f32 %v287, %v290
    %v292 = vmul.f32 %v291, 1.442695
    %v293 = vpow.pop %v292
    %v294 = vsel %vm206, %v293, 0.0
    %295 = vadd.xlane.f32.xlu0 %v294
    %v296 = vpop.xlane.xlu0 %295
    %v297 = vrcp.pop %v296
    %v298 = vmul.f32 %v296, %v297
    %v299 = vsub.f32 1.0, %v298
    %v300 = vmul.f32 %v297, %v299
    %v301 = vadd.f32 %v297, %v300
    %vm302 = vweird.f32 %v296
    %vm303 = vweird.f32 %v297
    %vm304 = vmor %vm302, %vm303
    %v305 = vsel %vm304, %v297, %v301
    %v306 = vand.u32 2147483647, %v296
    %vm307 = vcmp.eq.f32.partialorder %v306, 8.507059e+37
    %v308 = vand.u32 %v296, 2147483648
    %v309 = vor.u32 1.1754944e-38, %v308
    %v310 = vsel %vm307, %v309, %v305
    %v311 = vmul.f32 %v293, %v310
    %312 = vrot.lane.b32.xlu0 %v171, 48
    %v313 = vpop.permute.xlu0 %312
    %v316 = vsel %vm206, %v311, 0
    %318 = vmatpush.msra.mxu0 0.0
    %319 = vmatpush.msra.mxu0 0.0
    %320 = vmatpush.msra.mxu0 0.0
    %321 = vmatpush.msra.mxu0 0.0
    %322 = vmatpush.msra.mxu0 0.0
    %323 = vmatpush.msra.mxu0 0.0
    %324 = vmatpush.msra.mxu0 0.0
    %325 = vmatpush.msra.mxu0 0.0
    %326 = vmatpush.msra.mxu0 0.0
    %327 = vmatpush.msra.mxu0 0.0
    %328 = vmatpush.msra.mxu0 0.0
    %329 = vmatpush.msra.mxu0 0.0
    %330 = vmatpush.msra.mxu0 0.0
    %331 = vmatpush.msra.mxu0 0.0
    %332 = vmatpush.msra.mxu0 0.0
    %333 = vmatpush.msra.mxu0 %v313
    %334 = vmatmul.f32.gmra.mxu0 %v316
    %v335 = vpop.f32.mrf.mxu0
    %v336 = vadd.f32 0.0, %v335
    %337 = vdwg.mxu0
    %339 = vrot.lane.b32.xlu0 %v336, 16
    %v340 = vpop.permute.xlu0 %339
    %vm342 = vcmask 261248
    %343 = vst.msk [vmem:[#allocation2] sm:$0xff] %vm342, %v340
    %345 = vrot.lane.b32.xlu0 %v173, 96
    %v346 = vpop.permute.xlu0 %345
    %v347 = vsel %vm178, %v173, 0
    %v349 = vsel %vm178, %v346, 0
    %351 = vmatpush.xpose.msra.mxu0 0.0
    %352 = vmatpush.xpose.msra.mxu0 0.0
    %353 = vmatpush.xpose.msra.mxu0 0.0
    %354 = vmatpush.xpose.msra.mxu0 0.0
    %355 = vmatpush.xpose.msra.mxu0 0.0
    %356 = vmatpush.xpose.msra.mxu0 0.0
    %357 = vmatpush.xpose.msra.mxu0 0.0
    %358 = vmatpush.xpose.msra.mxu0 0.0
    %359 = vmatpush.xpose.msra.mxu0 0.0
    %360 = vmatpush.xpose.msra.mxu0 0.0
    %361 = vmatpush.xpose.msra.mxu0 0.0
    %362 = vmatpush.xpose.msra.mxu0 0.0
    %363 = vmatpush.xpose.msra.mxu0 0.0
    %364 = vmatpush.xpose.msra.mxu0 0.0
    %365 = vmatpush.xpose.msra.mxu0 0.0
    %366 = vmatpush.xpose.msra.mxu0 %v349
    %367 = vmatmul.f32.gmra.mxu0 %v347
    %v368 = vpop.f32.mrf.mxu0
    %v369 = vadd.f32 0.0, %v368
    %370 = vdwg.mxu0
    %v371 = vmul.f32 %v369, 0.25
    %v372 = vperm.slane %v136, 1
    %v373 = vadd.f32 %v371, %v372
    %v374 = vsel %vm206, %v373, -inf
    %375 = vmax.xlane.f32.xlu0 %v374
    %v376 = vpop.xlane.xlu0 %375
    %v377 = vsub.f32 %v373, %v376
    %v378 = vmul.f32 %v377, 1.442695
    %v379 = vpow.pop %v378
    %v380 = vsel %vm206, %v379, 0.0
    %381 = vadd.xlane.f32.xlu0 %v380
    %v382 = vpop.xlane.xlu0 %381
    %v383 = vrcp.pop %v382
    %v384 = vmul.f32 %v382, %v383
    %v385 = vsub.f32 1.0, %v384
    %v386 = vmul.f32 %v383, %v385
    %v387 = vadd.f32 %v383, %v386
    %vm388 = vweird.f32 %v382
    %vm389 = vweird.f32 %v383
    %vm390 = vmor %vm388, %vm389
    %v391 = vsel %vm390, %v383, %v387
    %v392 = vand.u32 2147483647, %v382
    %vm393 = vcmp.eq.f32.partialorder %v392, 8.507059e+37
    %v394 = vand.u32 %v382, 2147483648
    %v395 = vor.u32 1.1754944e-38, %v394
    %v396 = vsel %vm393, %v395, %v391
    %v397 = vmul.f32 %v379, %v396
    %398 = vrot.lane.b32.xlu0 %v173, 64
    %v399 = vpop.permute.xlu0 %398
    %v402 = vsel %vm206, %v397, 0
    %404 = vmatpush.msra.mxu0 0.0
    %405 = vmatpush.msra.mxu0 0.0
    %406 = vmatpush.msra.mxu0 0.0
    %407 = vmatpush.msra.mxu0 0.0
    %408 = vmatpush.msra.mxu0 0.0
    %409 = vmatpush.msra.mxu0 0.0
    %410 = vmatpush.msra.mxu0 0.0
    %411 = vmatpush.msra.mxu0 0.0
    %412 = vmatpush.msra.mxu0 0.0
    %413 = vmatpush.msra.mxu0 0.0
    %414 = vmatpush.msra.mxu0 0.0
    %415 = vmatpush.msra.mxu0 0.0
    %416 = vmatpush.msra.mxu0 0.0
    %417 = vmatpush.msra.mxu0 0.0
    %418 = vmatpush.msra.mxu0 0.0
    %419 = vmatpush.msra.mxu0 %v399
    %420 = vmatmul.f32.gmra.mxu0 %v402
    %v421 = vpop.f32.mrf.mxu0
    %v422 = vadd.f32 0.0, %v421
    %423 = vdwg.mxu0
    %424 = vst.msk [vmem:[#allocation2 + $0x8] sm:$0xff] %vm178, %v422
    %425 = vrot.lane.b32.xlu0 %v173, 112
    %v426 = vpop.permute.xlu0 %425
    %427 = vrot.lane.b32.xlu0 %v173, 80
    %v428 = vpop.permute.xlu0 %427
    %v429 = vsel %vm178, %v426, 0
    %v431 = vsel %vm178, %v428, 0
    %433 = vmatpush.xpose.msra.mxu0 0.0
    %434 = vmatpush.xpose.msra.mxu0 0.0
    %435 = vmatpush.xpose.msra.mxu0 0.0
    %436 = vmatpush.xpose.msra.mxu0 0.0
    %437 = vmatpush.xpose.msra.mxu0 0.0
    %438 = vmatpush.xpose.msra.mxu0 0.0
    %439 = vmatpush.xpose.msra.mxu0 0.0
    %440 = vmatpush.xpose.msra.mxu0 0.0
    %441 = vmatpush.xpose.msra.mxu0 0.0
    %442 = vmatpush.xpose.msra.mxu0 0.0
    %443 = vmatpush.xpose.msra.mxu0 0.0
    %444 = vmatpush.xpose.msra.mxu0 0.0
    %445 = vmatpush.xpose.msra.mxu0 0.0
    %446 = vmatpush.xpose.msra.mxu0 0.0
    %447 = vmatpush.xpose.msra.mxu0 0.0
    %448 = vmatpush.xpose.msra.mxu0 %v431
    %449 = vmatmul.f32.gmra.mxu0 %v429
    %v450 = vpop.f32.mrf.mxu0
    %v451 = vadd.f32 0.0, %v450
    %452 = vdwg.mxu0
    %v453 = vmul.f32 %v451, 0.25
    %v454 = vadd.f32 %v453, %v372
    %v455 = vsel %vm206, %v454, -inf
    %456 = vmax.xlane.f32.xlu0 %v455
    %v457 = vpop.xlane.xlu0 %456
    %v458 = vsub.f32 %v454, %v457
    %v459 = vmul.f32 %v458, 1.442695
    %v460 = vpow.pop %v459
    %v461 = vsel %vm206, %v460, 0.0
    %462 = vadd.xlane.f32.xlu0 %v461
    %v463 = vpop.xlane.xlu0 %462
    %v464 = vrcp.pop %v463
    %v465 = vmul.f32 %v463, %v464
    %v466 = vsub.f32 1.0, %v465
    %v467 = vmul.f32 %v464, %v466
    %v468 = vadd.f32 %v464, %v467
    %vm469 = vweird.f32 %v463
    %vm470 = vweird.f32 %v464
    %vm471 = vmor %vm469, %vm470
    %v472 = vsel %vm471, %v464, %v468
    %v473 = vand.u32 2147483647, %v463
    %vm474 = vcmp.eq.f32.partialorder %v473, 8.507059e+37
    %v475 = vand.u32 %v463, 2147483648
    %v476 = vor.u32 1.1754944e-38, %v475
    %v477 = vsel %vm474, %v476, %v472
    %v478 = vmul.f32 %v460, %v477
    %479 = vrot.lane.b32.xlu0 %v173, 48
    %v480 = vpop.permute.xlu0 %479
    %v483 = vsel %vm206, %v478, 0
    %485 = vmatpush.msra.mxu0 0.0
    %486 = vmatpush.msra.mxu0 0.0
    %487 = vmatpush.msra.mxu0 0.0
    %488 = vmatpush.msra.mxu0 0.0
    %489 = vmatpush.msra.mxu0 0.0
    %490 = vmatpush.msra.mxu0 0.0
    %491 = vmatpush.msra.mxu0 0.0
    %492 = vmatpush.msra.mxu0 0.0
    %493 = vmatpush.msra.mxu0 0.0
    %494 = vmatpush.msra.mxu0 0.0
    %495 = vmatpush.msra.mxu0 0.0
    %496 = vmatpush.msra.mxu0 0.0
    %497 = vmatpush.msra.mxu0 0.0
    %498 = vmatpush.msra.mxu0 0.0
    %499 = vmatpush.msra.mxu0 0.0
    %500 = vmatpush.msra.mxu0 %v480
    %501 = vmatmul.f32.gmra.mxu0 %v483
    %v502 = vpop.f32.mrf.mxu0
    %v503 = vadd.f32 0.0, %v502
    %504 = vdwg.mxu0
    %506 = vrot.lane.b32.xlu0 %v503, 16
    %v507 = vpop.permute.xlu0 %506
    %509 = vst.msk [vmem:[#allocation2 + $0x8] sm:$0xff] %vm342, %v507
    %v510 = vld [vmem:[#allocation2] sm:$0xff]
    %v511 = vld [vmem:[#allocation2 + $0x8] sm:$0xff]
    %v512 = vpack.c.bf16 %v511, %v510
    %v513 = vld [vmem:[%s7] sm:$0xf]
    %v514 = vld [vmem:[%s7 + $0x4] sm:$0xf]
    %v515 = vld [vmem:[%s7 + $0x8] sm:$0xf]
    %v516 = vld [vmem:[%s7 + $0xc] sm:$0xf]
    %v517 = vld [vmem:[%s8] sm:$0x1]
    %v519 = vperm.slane %v517, 0
    %v525 = vunpack.c.l.b16 %v513
    %v526 = vunpack.c.l.b16 %v514
    %v527 = vunpack.c.l.b16 %v515
    %v528 = vunpack.c.l.b16 %v516
    %v529 = vpack.c.b16 %v526, %v525
    %v530 = vpack.c.b16 %v528, %v527
    %v534 = vsel %vm74, %v512, 0
    %536 = vmatpush.bf16.msra.mxu0 0
    %537 = vmatpush.bf16.msra.mxu0 0
    %538 = vmatpush.bf16.msra.mxu0 0
    %539 = vmatpush.bf16.msra.mxu0 0
    %540 = vmatpush.bf16.msra.mxu0 0
    %541 = vmatpush.bf16.msra.mxu0 0
    %542 = vmatpush.bf16.msra.mxu0 %v530
    %543 = vmatpush.bf16.msra.mxu0 %v529
    %544 = vmatmul.bf16.gmra.mxu0 %v534
    %v545 = vpop.f32.mrf.mxu0
    %v546 = vadd.f32 %v519, %v545
    %v547 = vpop.f32.mrf.mxu0
    %v548 = vadd.f32 %v519, %v547
    %549 = vdwg.mxu0
    %v550 = vadd.f32 %v134, %v546
    %v551 = vadd.f32 %v135, %v548
    %v552 = vld [vmem:[%s9] sm:$0x1]
    %v553 = vld [vmem:[%s10] sm:$0x1]
    %v554 = vsel %vm74, %v550, 0.0
    %555 = vadd.xlane.f32.xlu0 %v554
    %v556 = vpop.xlane.xlu0 %555
    %v557 = vsel %vm74, %v551, 0.0
    %558 = vadd.xlane.f32.xlu0 %v557
    %v559 = vpop.xlane.xlu0 %558
    %v560 = vmul.f32 %v556, %v87
    %v561 = vmul.f32 %v559, %v87
    %v562 = vsub.f32 %v550, %v560
    %v563 = vsub.f32 %v551, %v561
    %v564 = vmul.f32 %v562, %v562
    %v565 = vmul.f32 %v563, %v563
    %v566 = vsel %vm74, %v564, 0.0
    %567 = vadd.xlane.f32.xlu0 %v566
    %v568 = vpop.xlane.xlu0 %567
    %v569 = vsel %vm74, %v565, 0.0
    %570 = vadd.xlane.f32.xlu0 %v569
    %v571 = vpop.xlane.xlu0 %570
    %v572 = vmul.f32 %v568, %v87
    %v573 = vmul.f32 %v571, %v87
    %v574 = vadd.f32 %v572, 1e-12
    %v575 = vadd.f32 %v573, 1e-12
    %v576 = vrsqrt.pop %v574
    %v577 = vmul.f32 %v576, %v574
    %v578 = vmul.f32 %v577, %v576
    %v579 = vmul.f32 0.5, %v578
    %v580 = vsub.f32 1.5, %v579
    %v581 = vmul.f32 %v576, %v580
    %vm582 = vweird.f32 %v574
    %vm583 = vweird.f32 %v576
    %vm584 = vmor %vm582, %vm583
    %v585 = vsel %vm584, %v576, %v581
    %v586 = vrsqrt.pop %v575
    %v587 = vmul.f32 %v586, %v575
    %v588 = vmul.f32 %v587, %v586
    %v589 = vmul.f32 0.5, %v588
    %v590 = vsub.f32 1.5, %v589
    %v591 = vmul.f32 %v586, %v590
    %vm592 = vweird.f32 %v575
    %vm593 = vweird.f32 %v586
    %vm594 = vmor %vm592, %vm593
    %v595 = vsel %vm594, %v586, %v591
    %v596 = vmul.f32 %v562, %v585
    %v597 = vmul.f32 %v563, %v595
    %v599 = vperm.slane %v552, 0
    %v601 = vmul.f32 %v596, %v599
    %v602 = vmul.f32 %v597, %v599
    %v604 = vperm.slane %v553, 0
    %v606 = vadd.f32 %v601, %v604
    %v607 = vadd.f32 %v602, %v604
    %v608 = vpack.c.bf16 %v607, %v606
    %v609 = vld [vmem:[%s11] sm:$0xf]
    %v610 = vld [vmem:[%s11 + $0x4] sm:$0xf]
    %v611 = vld [vmem:[%s11 + $0x8] sm:$0xf]
    %v612 = vld [vmem:[%s11 + $0xc] sm:$0xf]
    %v613 = vld [vmem:[%s12] sm:$0x1]
    %v615 = vperm.slane %v613, 0
    %v621 = vunpack.c.l.b16 %v609
    %v622 = vunpack.c.l.b16 %v610
    %v623 = vunpack.c.l.b16 %v611
    %v624 = vunpack.c.l.b16 %v612
    %v625 = vpack.c.b16 %v622, %v621
    %v626 = vpack.c.b16 %v624, %v623
    %v630 = vsel %vm74, %v608, 0
    %632 = vmatpush.bf16.msra.mxu0 0
    %633 = vmatpush.bf16.msra.mxu0 0
    %634 = vmatpush.bf16.msra.mxu0 0
    %635 = vmatpush.bf16.msra.mxu0 0
    %636 = vmatpush.bf16.msra.mxu0 0
    %637 = vmatpush.bf16.msra.mxu0 0
    %638 = vmatpush.bf16.msra.mxu0 %v626
    %639 = vmatpush.bf16.msra.mxu0 %v625
    %640 = vmatmul.bf16.gmra.mxu0 %v630
    %v641 = vpop.f32.mrf.mxu0
    %v642 = vadd.f32 %v615, %v641
    %v643 = vpop.f32.mrf.mxu0
    %v644 = vadd.f32 %v615, %v643
    %645 = vdwg.mxu0
    %v646 = vmul.f32 %v642, %v642
    %v647 = vmul.f32 %v644, %v644
    %v648 = vmul.f32 %v642, %v646
    %v649 = vmul.f32 %v644, %v647
    %v650 = vmul.f32 %v648, 0.044715
    %v651 = vmul.f32 %v649, 0.044715
    %v652 = vadd.f32 %v642, %v650
    %v653 = vadd.f32 %v644, %v651
    %v654 = vmul.f32 %v652, 0.7978846
    %v655 = vmul.f32 %v653, 0.7978846
    %v656 = vtanh.pop %v654
    %v657 = vtanh.pop %v655
    %v658 = vadd.f32 %v656, 1.0
    %v659 = vadd.f32 %v657, 1.0
    %v660 = vmul.f32 %v658, 0.5
    %v661 = vmul.f32 %v659, 0.5
    %v662 = vmul.f32 %v642, %v660
    %v663 = vmul.f32 %v644, %v661
    %v664 = vpack.c.bf16 %v663, %v662
    %v665 = vld [vmem:[%s13] sm:$0xf]
    %v666 = vld [vmem:[%s13 + $0x4] sm:$0xf]
    %v667 = vld [vmem:[%s13 + $0x8] sm:$0xf]
    %v668 = vld [vmem:[%s13 + $0xc] sm:$0xf]
    %v669 = vld [vmem:[%s13 + $0x10] sm:$0xf]
    %v670 = vld [vmem:[%s13 + $0x14] sm:$0xf]
    %v671 = vld [vmem:[%s13 + $0x18] sm:$0xf]
    %v672 = vld [vmem:[%s13 + $0x1c] sm:$0xf]
    %v673 = vld [vmem:[%s14] sm:$0x1]
    %v675 = vperm.slane %v673, 0
    %v685 = vunpack.c.l.b16 %v665
    %v686 = vunpack.c.l.b16 %v666
    %v687 = vunpack.c.l.b16 %v667
    %v688 = vunpack.c.l.b16 %v668
    %v689 = vunpack.c.l.b16 %v669
    %v690 = vunpack.c.l.b16 %v670
    %v691 = vunpack.c.l.b16 %v671
    %v692 = vunpack.c.l.b16 %v672
    %v693 = vpack.c.b16 %v686, %v685
    %v694 = vpack.c.b16 %v688, %v687
    %v695 = vpack.c.b16 %v690, %v689
    %v696 = vpack.c.b16 %v692, %v691
    %vm701 = vcmask 523264
    %v703 = vsel %vm701, %v664, 0
    %705 = vmatpush.bf16.msra.mxu0 0
    %706 = vmatpush.bf16.msra.mxu0 0
    %707 = vmatpush.bf16.msra.mxu0 0
    %708 = vmatpush.bf16.msra.mxu0 0
    %709 = vmatpush.bf16.msra.mxu0 %v696
    %710 = vmatpush.bf16.msra.mxu0 %v695
    %711 = vmatpush.bf16.msra.mxu0 %v694
    %712 = vmatpush.bf16.msra.mxu0 %v693
    %713 = vmatmul.bf16.gmra.mxu0 %v703
    %v714 = vpop.f32.mrf.mxu0
    %v715 = vadd.f32 %v675, %v714
    %v716 = vpop.f32.mrf.mxu0
    %v717 = vadd.f32 %v675, %v716
    %718 = vdwg.mxu0
    %v719 = vadd.f32 %v606, %v715
    %v720 = vadd.f32 %v607, %v717
    %v721 = vld [vmem:[%s15] sm:$0x1]
    %v722 = vld [vmem:[%s16] sm:$0x1]
    %v723 = vsel %vm74, %v719, 0.0
    %724 = vadd.xlane.f32.xlu0 %v723
    %v725 = vpop.xlane.xlu0 %724
    %v726 = vsel %vm74, %v720, 0.0
    %727 = vadd.xlane.f32.xlu0 %v726
    %v728 = vpop.xlane.xlu0 %727
    %v729 = vmul.f32 %v725, %v87
    %v730 = vmul.f32 %v728, %v87
    %v731 = vsub.f32 %v719, %v729
    %v732 = vsub.f32 %v720, %v730
    %v733 = vmul.f32 %v731, %v731
    %v734 = vmul.f32 %v732, %v732
    %v735 = vsel %vm74, %v733, 0.0
    %736 = vadd.xlane.f32.xlu0 %v735
    %v737 = vpop.xlane.xlu0 %736
    %v738 = vsel %vm74, %v734, 0.0
    %739 = vadd.xlane.f32.xlu0 %v738
    %v740 = vpop.xlane.xlu0 %739
    %v741 = vmul.f32 %v737, %v87
    %v742 = vmul.f32 %v740, %v87
    %v743 = vadd.f32 %v741, 1e-12
    %v744 = vadd.f32 %v742, 1e-12
    %v745 = vrsqrt.pop %v743
    %v746 = vmul.f32 %v745, %v743
    %v747 = vmul.f32 %v746, %v745
    %v748 = vmul.f32 0.5, %v747
    %v749 = vsub.f32 1.5, %v748
    %v750 = vmul.f32 %v745, %v749
    %vm751 = vweird.f32 %v743
    %vm752 = vweird.f32 %v745
    %vm753 = vmor %vm751, %vm752
    %v754 = vsel %vm753, %v745, %v750
    %v755 = vrsqrt.pop %v744
    %v756 = vmul.f32 %v755, %v744
    %v757 = vmul.f32 %v756, %v755
    %v758 = vmul.f32 0.5, %v757
    %v759 = vsub.f32 1.5, %v758
    %v760 = vmul.f32 %v755, %v759
    %vm761 = vweird.f32 %v744
    %vm762 = vweird.f32 %v755
    %vm763 = vmor %vm761, %vm762
    %v764 = vsel %vm763, %v755, %v760
    %v765 = vmul.f32 %v731, %v754
    %v766 = vmul.f32 %v732, %v764
    %v768 = vperm.slane %v721, 0
    %v770 = vmul.f32 %v765, %v768
    %v771 = vmul.f32 %v766, %v768
    %v773 = vperm.slane %v722, 0
    %v775 = vadd.f32 %v770, %v773
    %v776 = vadd.f32 %v771, %v773
    %v777 = vpack.c.bf16 %v776, %v775
    %s778 = scalar_lea.vmem %s5, 16
    %v779 = vld [vmem:[%s778] sm:$0xf]
    %v780 = vld [vmem:[%s778 + $0x4] sm:$0xf]
    %v781 = vld [vmem:[%s778 + $0x8] sm:$0xf]
    %v782 = vld [vmem:[%s778 + $0xc] sm:$0xf]
    %s783 = scalar_lea.vmem %s6, 1
    %v784 = vld [vmem:[%s783] sm:$0x1]
    %v786 = vperm.slane %v784, 0
    %v792 = vunpack.c.l.b16 %v779
    %v793 = vunpack.c.l.b16 %v780
    %v794 = vunpack.c.l.b16 %v781
    %v795 = vunpack.c.l.b16 %v782
    %v796 = vpack.c.b16 %v793, %v792
    %v797 = vpack.c.b16 %v795, %v794
    %v801 = vsel %vm74, %v777, 0
    %803 = vmatpush.bf16.msra.mxu0 0
    %804 = vmatpush.bf16.msra.mxu0 0
    %805 = vmatpush.bf16.msra.mxu0 0
    %806 = vmatpush.bf16.msra.mxu0 0
    %807 = vmatpush.bf16.msra.mxu0 0
    %808 = vmatpush.bf16.msra.mxu0 0
    %809 = vmatpush.bf16.msra.mxu0 %v797
    %810 = vmatpush.bf16.msra.mxu0 %v796
    %811 = vmatmul.bf16.gmra.mxu0 %v801
    %v812 = vpop.f32.mrf.mxu0
    %v813 = vadd.f32 %v786, %v812
    %v814 = vpop.f32.mrf.mxu0
    %v815 = vadd.f32 %v786, %v814
    %816 = vdwg.mxu0
    %818 = vrot.lane.b32.xlu0 %v813, 96
    %v819 = vpop.permute.xlu0 %818
    %v820 = vsel %vm178, %v813, 0
    %v822 = vsel %vm178, %v819, 0
    %824 = vmatpush.xpose.msra.mxu0 0.0
    %825 = vmatpush.xpose.msra.mxu0 0.0
    %826 = vmatpush.xpose.msra.mxu0 0.0
    %827 = vmatpush.xpose.msra.mxu0 0.0
    %828 = vmatpush.xpose.msra.mxu0 0.0
    %829 = vmatpush.xpose.msra.mxu0 0.0
    %830 = vmatpush.xpose.msra.mxu0 0.0
    %831 = vmatpush.xpose.msra.mxu0 0.0
    %832 = vmatpush.xpose.msra.mxu0 0.0
    %833 = vmatpush.xpose.msra.mxu0 0.0
    %834 = vmatpush.xpose.msra.mxu0 0.0
    %835 = vmatpush.xpose.msra.mxu0 0.0
    %836 = vmatpush.xpose.msra.mxu0 0.0
    %837 = vmatpush.xpose.msra.mxu0 0.0
    %838 = vmatpush.xpose.msra.mxu0 0.0
    %839 = vmatpush.xpose.msra.mxu0 %v822
    %840 = vmatmul.f32.gmra.mxu0 %v820
    %v841 = vpop.f32.mrf.mxu0
    %v842 = vadd.f32 0.0, %v841
    %843 = vdwg.mxu0
    %v844 = vmul.f32 %v842, 0.25
    %v845 = vadd.f32 %v844, %v204
    %v846 = vsel %vm206, %v845, -inf
    %847 = vmax.xlane.f32.xlu0 %v846
    %v848 = vpop.xlane.xlu0 %847
    %v849 = vsub.f32 %v845, %v848
    %v850 = vmul.f32 %v849, 1.442695
    %v851 = vpow.pop %v850
    %v852 = vsel %vm206, %v851, 0.0
    %853 = vadd.xlane.f32.xlu0 %v852
    %v854 = vpop.xlane.xlu0 %853
    %v855 = vrcp.pop %v854
    %v856 = vmul.f32 %v854, %v855
    %v857 = vsub.f32 1.0, %v856
    %v858 = vmul.f32 %v855, %v857
    %v859 = vadd.f32 %v855, %v858
    %vm860 = vweird.f32 %v854
    %vm861 = vweird.f32 %v855
    %vm862 = vmor %vm860, %vm861
    %v863 = vsel %vm862, %v855, %v859
    %v864 = vand.u32 2147483647, %v854
    %vm865 = vcmp.eq.f32.partialorder %v864, 8.507059e+37
    %v866 = vand.u32 %v854, 2147483648
    %v867 = vor.u32 1.1754944e-38, %v866
    %v868 = vsel %vm865, %v867, %v863
    %v869 = vmul.f32 %v851, %v868
    %870 = vrot.lane.b32.xlu0 %v813, 64
    %v871 = vpop.permute.xlu0 %870
    %v874 = vsel %vm206, %v869, 0
    %876 = vmatpush.msra.mxu0 0.0
    %877 = vmatpush.msra.mxu0 0.0
    %878 = vmatpush.msra.mxu0 0.0
    %879 = vmatpush.msra.mxu0 0.0
    %880 = vmatpush.msra.mxu0 0.0
    %881 = vmatpush.msra.mxu0 0.0
    %882 = vmatpush.msra.mxu0 0.0
    %883 = vmatpush.msra.mxu0 0.0
    %884 = vmatpush.msra.mxu0 0.0
    %885 = vmatpush.msra.mxu0 0.0
    %886 = vmatpush.msra.mxu0 0.0
    %887 = vmatpush.msra.mxu0 0.0
    %888 = vmatpush.msra.mxu0 0.0
    %889 = vmatpush.msra.mxu0 0.0
    %890 = vmatpush.msra.mxu0 0.0
    %891 = vmatpush.msra.mxu0 %v871
    %892 = vmatmul.f32.gmra.mxu0 %v874
    %v893 = vpop.f32.mrf.mxu0
    %v894 = vadd.f32 0.0, %v893
    %895 = vdwg.mxu0
    %896 = vst.msk [vmem:[#allocation2] sm:$0xff] %vm178, %v894
    %897 = vrot.lane.b32.xlu0 %v813, 112
    %v898 = vpop.permute.xlu0 %897
    %899 = vrot.lane.b32.xlu0 %v813, 80
    %v900 = vpop.permute.xlu0 %899
    %v901 = vsel %vm178, %v898, 0
    %v903 = vsel %vm178, %v900, 0
    %905 = vmatpush.xpose.msra.mxu0 0.0
    %906 = vmatpush.xpose.msra.mxu0 0.0
    %907 = vmatpush.xpose.msra.mxu0 0.0
    %908 = vmatpush.xpose.msra.mxu0 0.0
    %909 = vmatpush.xpose.msra.mxu0 0.0
    %910 = vmatpush.xpose.msra.mxu0 0.0
    %911 = vmatpush.xpose.msra.mxu0 0.0
    %912 = vmatpush.xpose.msra.mxu0 0.0
    %913 = vmatpush.xpose.msra.mxu0 0.0
    %914 = vmatpush.xpose.msra.mxu0 0.0
    %915 = vmatpush.xpose.msra.mxu0 0.0
    %916 = vmatpush.xpose.msra.mxu0 0.0
    %917 = vmatpush.xpose.msra.mxu0 0.0
    %918 = vmatpush.xpose.msra.mxu0 0.0
    %919 = vmatpush.xpose.msra.mxu0 0.0
    %920 = vmatpush.xpose.msra.mxu0 %v903
    %921 = vmatmul.f32.gmra.mxu0 %v901
    %v922 = vpop.f32.mrf.mxu0
    %v923 = vadd.f32 0.0, %v922
    %924 = vdwg.mxu0
    %v925 = vmul.f32 %v923, 0.25
    %v926 = vadd.f32 %v925, %v204
    %v927 = vsel %vm206, %v926, -inf
    %928 = vmax.xlane.f32.xlu0 %v927
    %v929 = vpop.xlane.xlu0 %928
    %v930 = vsub.f32 %v926, %v929
    %v931 = vmul.f32 %v930, 1.442695
    %v932 = vpow.pop %v931
    %v933 = vsel %vm206, %v932, 0.0
    %934 = vadd.xlane.f32.xlu0 %v933
    %v935 = vpop.xlane.xlu0 %934
    %v936 = vrcp.pop %v935
    %v937 = vmul.f32 %v935, %v936
    %v938 = vsub.f32 1.0, %v937
    %v939 = vmul.f32 %v936, %v938
    %v940 = vadd.f32 %v936, %v939
    %vm941 = vweird.f32 %v935
    %vm942 = vweird.f32 %v936
    %vm943 = vmor %vm941, %vm942
    %v944 = vsel %vm943, %v936, %v940
    %v945 = vand.u32 2147483647, %v935
    %vm946 = vcmp.eq.f32.partialorder %v945, 8.507059e+37
    %v947 = vand.u32 %v935, 2147483648
    %v948 = vor.u32 1.1754944e-38, %v947
    %v949 = vsel %vm946, %v948, %v944
    %v950 = vmul.f32 %v932, %v949
    %951 = vrot.lane.b32.xlu0 %v813, 48
    %v952 = vpop.permute.xlu0 %951
    %v955 = vsel %vm206, %v950, 0
    %957 = vmatpush.msra.mxu0 0.0
    %958 = vmatpush.msra.mxu0 0.0
    %959 = vmatpush.msra.mxu0 0.0
    %960 = vmatpush.msra.mxu0 0.0
    %961 = vmatpush.msra.mxu0 0.0
    %962 = vmatpush.msra.mxu0 0.0
    %963 = vmatpush.msra.mxu0 0.0
    %964 = vmatpush.msra.mxu0 0.0
    %965 = vmatpush.msra.mxu0 0.0
    %966 = vmatpush.msra.mxu0 0.0
    %967 = vmatpush.msra.mxu0 0.0
    %968 = vmatpush.msra.mxu0 0.0
    %969 = vmatpush.msra.mxu0 0.0
    %970 = vmatpush.msra.mxu0 0.0
    %971 = vmatpush.msra.mxu0 0.0
    %972 = vmatpush.msra.mxu0 %v952
    %973 = vmatmul.f32.gmra.mxu0 %v955
    %v974 = vpop.f32.mrf.mxu0
    %v975 = vadd.f32 0.0, %v974
    %976 = vdwg.mxu0
    %978 = vrot.lane.b32.xlu0 %v975, 16
    %v979 = vpop.permute.xlu0 %978
    %981 = vst.msk [vmem:[#allocation2] sm:$0xff] %vm342, %v979
    %983 = vrot.lane.b32.xlu0 %v815, 96
    %v984 = vpop.permute.xlu0 %983
    %v985 = vsel %vm178, %v815, 0
    %v987 = vsel %vm178, %v984, 0
    %989 = vmatpush.xpose.msra.mxu0 0.0
    %990 = vmatpush.xpose.msra.mxu0 0.0
    %991 = vmatpush.xpose.msra.mxu0 0.0
    %992 = vmatpush.xpose.msra.mxu0 0.0
    %993 = vmatpush.xpose.msra.mxu0 0.0
    %994 = vmatpush.xpose.msra.mxu0 0.0
    %995 = vmatpush.xpose.msra.mxu0 0.0
    %996 = vmatpush.xpose.msra.mxu0 0.0
    %997 = vmatpush.xpose.msra.mxu0 0.0
    %998 = vmatpush.xpose.msra.mxu0 0.0
    %999 = vmatpush.xpose.msra.mxu0 0.0
    %1000 = vmatpush.xpose.msra.mxu0 0.0
    %1001 = vmatpush.xpose.msra.mxu0 0.0
    %1002 = vmatpush.xpose.msra.mxu0 0.0
    %1003 = vmatpush.xpose.msra.mxu0 0.0
    %1004 = vmatpush.xpose.msra.mxu0 %v987
    %1005 = vmatmul.f32.gmra.mxu0 %v985
    %v1006 = vpop.f32.mrf.mxu0
    %v1007 = vadd.f32 0.0, %v1006
    %1008 = vdwg.mxu0
    %v1009 = vmul.f32 %v1007, 0.25
    %v1010 = vadd.f32 %v1009, %v372
    %v1011 = vsel %vm206, %v1010, -inf
    %1012 = vmax.xlane.f32.xlu0 %v1011
    %v1013 = vpop.xlane.xlu0 %1012
    %v1014 = vsub.f32 %v1010, %v1013
    %v1015 = vmul.f32 %v1014, 1.442695
    %v1016 = vpow.pop %v1015
    %v1017 = vsel %vm206, %v1016, 0.0
    %1018 = vadd.xlane.f32.xlu0 %v1017
    %v1019 = vpop.xlane.xlu0 %1018
    %v1020 = vrcp.pop %v1019
    %v1021 = vmul.f32 %v1019, %v1020
    %v1022 = vsub.f32 1.0, %v1021
    %v1023 = vmul.f32 %v1020, %v1022
    %v1024 = vadd.f32 %v1020, %v1023
    %vm1025 = vweird.f32 %v1019
    %vm1026 = vweird.f32 %v1020
    %vm1027 = vmor %vm1025, %vm1026
    %v1028 = vsel %vm1027, %v1020, %v1024
    %v1029 = vand.u32 2147483647, %v1019
    %vm1030 = vcmp.eq.f32.partialorder %v1029, 8.507059e+37
    %v1031 = vand.u32 %v1019, 2147483648
    %v1032 = vor.u32 1.1754944e-38, %v1031
    %v1033 = vsel %vm1030, %v1032, %v1028
    %v1034 = vmul.f32 %v1016, %v1033
    %1035 = vrot.lane.b32.xlu0 %v815, 64
    %v1036 = vpop.permute.xlu0 %1035
    %v1039 = vsel %vm206, %v1034, 0
    %1041 = vmatpush.msra.mxu0 0.0
    %1042 = vmatpush.msra.mxu0 0.0
    %1043 = vmatpush.msra.mxu0 0.0
    %1044 = vmatpush.msra.mxu0 0.0
    %1045 = vmatpush.msra.mxu0 0.0
    %1046 = vmatpush.msra.mxu0 0.0
    %1047 = vmatpush.msra.mxu0 0.0
    %1048 = vmatpush.msra.mxu0 0.0
    %1049 = vmatpush.msra.mxu0 0.0
    %1050 = vmatpush.msra.mxu0 0.0
    %1051 = vmatpush.msra.mxu0 0.0
    %1052 = vmatpush.msra.mxu0 0.0
    %1053 = vmatpush.msra.mxu0 0.0
    %1054 = vmatpush.msra.mxu0 0.0
    %1055 = vmatpush.msra.mxu0 0.0
    %1056 = vmatpush.msra.mxu0 %v1036
    %1057 = vmatmul.f32.gmra.mxu0 %v1039
    %v1058 = vpop.f32.mrf.mxu0
    %v1059 = vadd.f32 0.0, %v1058
    %1060 = vdwg.mxu0
    %1061 = vst.msk [vmem:[#allocation2 + $0x8] sm:$0xff] %vm178, %v1059
    %1062 = vrot.lane.b32.xlu0 %v815, 112
    %v1063 = vpop.permute.xlu0 %1062
    %1064 = vrot.lane.b32.xlu0 %v815, 80
    %v1065 = vpop.permute.xlu0 %1064
    %v1066 = vsel %vm178, %v1063, 0
    %v1068 = vsel %vm178, %v1065, 0
    %1070 = vmatpush.xpose.msra.mxu0 0.0
    %1071 = vmatpush.xpose.msra.mxu0 0.0
    %1072 = vmatpush.xpose.msra.mxu0 0.0
    %1073 = vmatpush.xpose.msra.mxu0 0.0
    %1074 = vmatpush.xpose.msra.mxu0 0.0
    %1075 = vmatpush.xpose.msra.mxu0 0.0
    %1076 = vmatpush.xpose.msra.mxu0 0.0
    %1077 = vmatpush.xpose.msra.mxu0 0.0
    %1078 = vmatpush.xpose.msra.mxu0 0.0
    %1079 = vmatpush.xpose.msra.mxu0 0.0
    %1080 = vmatpush.xpose.msra.mxu0 0.0
    %1081 = vmatpush.xpose.msra.mxu0 0.0
    %1082 = vmatpush.xpose.msra.mxu0 0.0
    %1083 = vmatpush.xpose.msra.mxu0 0.0
    %1084 = vmatpush.xpose.msra.mxu0 0.0
    %1085 = vmatpush.xpose.msra.mxu0 %v1068
    %1086 = vmatmul.f32.gmra.mxu0 %v1066
    %v1087 = vpop.f32.mrf.mxu0
    %v1088 = vadd.f32 0.0, %v1087
    %1089 = vdwg.mxu0
    %v1090 = vmul.f32 %v1088, 0.25
    %v1091 = vadd.f32 %v1090, %v372
    %v1092 = vsel %vm206, %v1091, -inf
    %1093 = vmax.xlane.f32.xlu0 %v1092
    %v1094 = vpop.xlane.xlu0 %1093
    %v1095 = vsub.f32 %v1091, %v1094
    %v1096 = vmul.f32 %v1095, 1.442695
    %v1097 = vpow.pop %v1096
    %v1098 = vsel %vm206, %v1097, 0.0
    %1099 = vadd.xlane.f32.xlu0 %v1098
    %v1100 = vpop.xlane.xlu0 %1099
    %v1101 = vrcp.pop %v1100
    %v1102 = vmul.f32 %v1100, %v1101
    %v1103 = vsub.f32 1.0, %v1102
    %v1104 = vmul.f32 %v1101, %v1103
    %v1105 = vadd.f32 %v1101, %v1104
    %vm1106 = vweird.f32 %v1100
    %vm1107 = vweird.f32 %v1101
    %vm1108 = vmor %vm1106, %vm1107
    %v1109 = vsel %vm1108, %v1101, %v1105
    %v1110 = vand.u32 2147483647, %v1100
    %vm1111 = vcmp.eq.f32.partialorder %v1110, 8.507059e+37
    %v1112 = vand.u32 %v1100, 2147483648
    %v1113 = vor.u32 1.1754944e-38, %v1112
    %v1114 = vsel %vm1111, %v1113, %v1109
    %v1115 = vmul.f32 %v1097, %v1114
    %1116 = vrot.lane.b32.xlu0 %v815, 48
    %v1117 = vpop.permute.xlu0 %1116
    %v1120 = vsel %vm206, %v1115, 0
    %1122 = vmatpush.msra.mxu0 0.0
    %1123 = vmatpush.msra.mxu0 0.0
    %1124 = vmatpush.msra.mxu0 0.0
    %1125 = vmatpush.msra.mxu0 0.0
    %1126 = vmatpush.msra.mxu0 0.0
    %1127 = vmatpush.msra.mxu0 0.0
    %1128 = vmatpush.msra.mxu0 0.0
    %1129 = vmatpush.msra.mxu0 0.0
    %1130 = vmatpush.msra.mxu0 0.0
    %1131 = vmatpush.msra.mxu0 0.0
    %1132 = vmatpush.msra.mxu0 0.0
    %1133 = vmatpush.msra.mxu0 0.0
    %1134 = vmatpush.msra.mxu0 0.0
    %1135 = vmatpush.msra.mxu0 0.0
    %1136 = vmatpush.msra.mxu0 0.0
    %1137 = vmatpush.msra.mxu0 %v1117
    %1138 = vmatmul.f32.gmra.mxu0 %v1120
    %v1139 = vpop.f32.mrf.mxu0
    %v1140 = vadd.f32 0.0, %v1139
    %1141 = vdwg.mxu0
    %1143 = vrot.lane.b32.xlu0 %v1140, 16
    %v1144 = vpop.permute.xlu0 %1143
    %1146 = vst.msk [vmem:[#allocation2 + $0x8] sm:$0xff] %vm342, %v1144
    %v1147 = vld [vmem:[#allocation2] sm:$0xff]
    %v1148 = vld [vmem:[#allocation2 + $0x8] sm:$0xff]
    %v1149 = vpack.c.bf16 %v1148, %v1147
    %s1150 = scalar_lea.vmem %s7, 16
    %v1151 = vld [vmem:[%s1150] sm:$0xf]
    %v1152 = vld [vmem:[%s1150 + $0x4] sm:$0xf]
    %v1153 = vld [vmem:[%s1150 + $0x8] sm:$0xf]
    %v1154 = vld [vmem:[%s1150 + $0xc] sm:$0xf]
    %s1155 = scalar_lea.vmem %s8, 1
    %v1156 = vld [vmem:[%s1155] sm:$0x1]
    %v1158 = vperm.slane %v1156, 0
    %v1164 = vunpack.c.l.b16 %v1151
    %v1165 = vunpack.c.l.b16 %v1152
    %v1166 = vunpack.c.l.b16 %v1153
    %v1167 = vunpack.c.l.b16 %v1154
    %v1168 = vpack.c.b16 %v1165, %v1164
    %v1169 = vpack.c.b16 %v1167, %v1166
    %v1173 = vsel %vm74, %v1149, 0
    %1175 = vmatpush.bf16.msra.mxu0 0
    %1176 = vmatpush.bf16.msra.mxu0 0
    %1177 = vmatpush.bf16.msra.mxu0 0
    %1178 = vmatpush.bf16.msra.mxu0 0
    %1179 = vmatpush.bf16.msra.mxu0 0
    %1180 = vmatpush.bf16.msra.mxu0 0
    %1181 = vmatpush.bf16.msra.mxu0 %v1169
    %1182 = vmatpush.bf16.msra.mxu0 %v1168
    %1183 = vmatmul.bf16.gmra.mxu0 %v1173
    %v1184 = vpop.f32.mrf.mxu0
    %v1185 = vadd.f32 %v1158, %v1184
    %v1186 = vpop.f32.mrf.mxu0
    %v1187 = vadd.f32 %v1158, %v1186
    %1188 = vdwg.mxu0
    %v1189 = vadd.f32 %v775, %v1185
    %v1190 = vadd.f32 %v776, %v1187
    %s1191 = scalar_lea.vmem %s9, 1
    %v1192 = vld [vmem:[%s1191] sm:$0x1]
    %s1193 = scalar_lea.vmem %s10, 1
    %v1194 = vld [vmem:[%s1193] sm:$0x1]
    %v1195 = vsel %vm74, %v1189, 0.0
    %1196 = vadd.xlane.f32.xlu0 %v1195
    %v1197 = vpop.xlane.xlu0 %1196
    %v1198 = vsel %vm74, %v1190, 0.0
    %1199 = vadd.xlane.f32.xlu0 %v1198
    %v1200 = vpop.xlane.xlu0 %1199
    %v1201 = vmul.f32 %v1197, %v87
    %v1202 = vmul.f32 %v1200, %v87
    %v1203 = vsub.f32 %v1189, %v1201
    %v1204 = vsub.f32 %v1190, %v1202
    %v1205 = vmul.f32 %v1203, %v1203
    %v1206 = vmul.f32 %v1204, %v1204
    %v1207 = vsel %vm74, %v1205, 0.0
    %1208 = vadd.xlane.f32.xlu0 %v1207
    %v1209 = vpop.xlane.xlu0 %1208
    %v1210 = vsel %vm74, %v1206, 0.0
    %1211 = vadd.xlane.f32.xlu0 %v1210
    %v1212 = vpop.xlane.xlu0 %1211
    %v1213 = vmul.f32 %v1209, %v87
    %v1214 = vmul.f32 %v1212, %v87
    %v1215 = vadd.f32 %v1213, 1e-12
    %v1216 = vadd.f32 %v1214, 1e-12
    %v1217 = vrsqrt.pop %v1215
    %v1218 = vmul.f32 %v1217, %v1215
    %v1219 = vmul.f32 %v1218, %v1217
    %v1220 = vmul.f32 0.5, %v1219
    %v1221 = vsub.f32 1.5, %v1220
    %v1222 = vmul.f32 %v1217, %v1221
    %vm1223 = vweird.f32 %v1215
    %vm1224 = vweird.f32 %v1217
    %vm1225 = vmor %vm1223, %vm1224
    %v1226 = vsel %vm1225, %v1217, %v1222
    %v1227 = vrsqrt.pop %v1216
    %v1228 = vmul.f32 %v1227, %v1216
    %v1229 = vmul.f32 %v1228, %v1227
    %v1230 = vmul.f32 0.5, %v1229
    %v1231 = vsub.f32 1.5, %v1230
    %v1232 = vmul.f32 %v1227, %v1231
    %vm1233 = vweird.f32 %v1216
    %vm1234 = vweird.f32 %v1227
    %vm1235 = vmor %vm1233, %vm1234
    %v1236 = vsel %vm1235, %v1227, %v1232
    %v1237 = vmul.f32 %v1203, %v1226
    %v1238 = vmul.f32 %v1204, %v1236
    %v1240 = vperm.slane %v1192, 0
    %v1242 = vmul.f32 %v1237, %v1240
    %v1243 = vmul.f32 %v1238, %v1240
    %v1245 = vperm.slane %v1194, 0
    %v1247 = vadd.f32 %v1242, %v1245
    %v1248 = vadd.f32 %v1243, %v1245
    %v1249 = vpack.c.bf16 %v1248, %v1247
    %s1250 = scalar_lea.vmem %s11, 16
    %v1251 = vld [vmem:[%s1250] sm:$0xf]
    %v1252 = vld [vmem:[%s1250 + $0x4] sm:$0xf]
    %v1253 = vld [vmem:[%s1250 + $0x8] sm:$0xf]
    %v1254 = vld [vmem:[%s1250 + $0xc] sm:$0xf]
    %s1255 = scalar_lea.vmem %s12, 1
    %v1256 = vld [vmem:[%s1255] sm:$0x1]
    %v1258 = vperm.slane %v1256, 0
    %v1264 = vunpack.c.l.b16 %v1251
    %v1265 = vunpack.c.l.b16 %v1252
    %v1266 = vunpack.c.l.b16 %v1253
    %v1267 = vunpack.c.l.b16 %v1254
    %v1268 = vpack.c.b16 %v1265, %v1264
    %v1269 = vpack.c.b16 %v1267, %v1266
    %v1273 = vsel %vm74, %v1249, 0
    %1275 = vmatpush.bf16.msra.mxu0 0
    %1276 = vmatpush.bf16.msra.mxu0 0
    %1277 = vmatpush.bf16.msra.mxu0 0
    %1278 = vmatpush.bf16.msra.mxu0 0
    %1279 = vmatpush.bf16.msra.mxu0 0
    %1280 = vmatpush.bf16.msra.mxu0 0
    %1281 = vmatpush.bf16.msra.mxu0 %v1269
    %1282 = vmatpush.bf16.msra.mxu0 %v1268
    %1283 = vmatmul.bf16.gmra.mxu0 %v1273
    %v1284 = vpop.f32.mrf.mxu0
    %v1285 = vadd.f32 %v1258, %v1284
    %v1286 = vpop.f32.mrf.mxu0
    %v1287 = vadd.f32 %v1258, %v1286
    %1288 = vdwg.mxu0
    %v1289 = vmul.f32 %v1285, %v1285
    %v1290 = vmul.f32 %v1287, %v1287
    %v1291 = vmul.f32 %v1285, %v1289
    %v1292 = vmul.f32 %v1287, %v1290
    %v1293 = vmul.f32 %v1291, 0.044715
    %v1294 = vmul.f32 %v1292, 0.044715
    %v1295 = vadd.f32 %v1285, %v1293
    %v1296 = vadd.f32 %v1287, %v1294
    %v1297 = vmul.f32 %v1295, 0.7978846
    %v1298 = vmul.f32 %v1296, 0.7978846
    %v1299 = vtanh.pop %v1297
    %v1300 = vtanh.pop %v1298
    %v1301 = vadd.f32 %v1299, 1.0
    %v1302 = vadd.f32 %v1300, 1.0
    %v1303 = vmul.f32 %v1301, 0.5
    %v1304 = vmul.f32 %v1302, 0.5
    %v1305 = vmul.f32 %v1285, %v1303
    %v1306 = vmul.f32 %v1287, %v1304
    %v1307 = vpack.c.bf16 %v1306, %v1305
    %s1308 = scalar_lea.vmem %s13, 32
    %v1309 = vld [vmem:[%s1308] sm:$0xf]
    %v1310 = vld [vmem:[%s1308 + $0x4] sm:$0xf]
    %v1311 = vld [vmem:[%s1308 + $0x8] sm:$0xf]
    %v1312 = vld [vmem:[%s1308 + $0xc] sm:$0xf]
    %v1313 = vld [vmem:[%s1308 + $0x10] sm:$0xf]
    %v1314 = vld [vmem:[%s1308 + $0x14] sm:$0xf]
    %v1315 = vld [vmem:[%s1308 + $0x18] sm:$0xf]
    %v1316 = vld [vmem:[%s1308 + $0x1c] sm:$0xf]
    %s1317 = scalar_lea.vmem %s14, 1
    %v1318 = vld [vmem:[%s1317] sm:$0x1]
    %v1320 = vperm.slane %v1318, 0
    %v1330 = vunpack.c.l.b16 %v1309
    %v1331 = vunpack.c.l.b16 %v1310
    %v1332 = vunpack.c.l.b16 %v1311
    %v1333 = vunpack.c.l.b16 %v1312
    %v1334 = vunpack.c.l.b16 %v1313
    %v1335 = vunpack.c.l.b16 %v1314
    %v1336 = vunpack.c.l.b16 %v1315
    %v1337 = vunpack.c.l.b16 %v1316
    %v1338 = vpack.c.b16 %v1331, %v1330
    %v1339 = vpack.c.b16 %v1333, %v1332
    %v1340 = vpack.c.b16 %v1335, %v1334
    %v1341 = vpack.c.b16 %v1337, %v1336
    %v1347 = vsel %vm701, %v1307, 0
    %1349 = vmatpush.bf16.msra.mxu0 0
    %1350 = vmatpush.bf16.msra.mxu0 0
    %1351 = vmatpush.bf16.msra.mxu0 0
    %1352 = vmatpush.bf16.msra.mxu0 0
    %1353 = vmatpush.bf16.msra.mxu0 %v1341
    %1354 = vmatpush.bf16.msra.mxu0 %v1340
    %1355 = vmatpush.bf16.msra.mxu0 %v1339
    %1356 = vmatpush.bf16.msra.mxu0 %v1338
    %1357 = vmatmul.bf16.gmra.mxu0 %v1347
    %v1358 = vpop.f32.mrf.mxu0
    %v1359 = vadd.f32 %v1320, %v1358
    %v1360 = vpop.f32.mrf.mxu0
    %v1361 = vadd.f32 %v1320, %v1360
    %1362 = vdwg.mxu0
    %v1363 = vadd.f32 %v1247, %v1359
    %v1364 = vadd.f32 %v1248, %v1361
    %s1365 = scalar_lea.vmem %s15, 1
    %v1366 = vld [vmem:[%s1365] sm:$0x1]
    %s1367 = scalar_lea.vmem %s16, 1
    %v1368 = vld [vmem:[%s1367] sm:$0x1]
    %v1369 = vsel %vm74, %v1363, 0.0
    %1370 = vadd.xlane.f32.xlu0 %v1369
    %v1371 = vpop.xlane.xlu0 %1370
    %v1372 = vsel %vm74, %v1364, 0.0
    %1373 = vadd.xlane.f32.xlu0 %v1372
    %v1374 = vpop.xlane.xlu0 %1373
    %v1375 = vmul.f32 %v1371, %v87
    %v1376 = vmul.f32 %v1374, %v87
    %v1377 = vsub.f32 %v1363, %v1375
    %v1378 = vsub.f32 %v1364, %v1376
    %v1379 = vmul.f32 %v1377, %v1377
    %v1380 = vmul.f32 %v1378, %v1378
    %v1381 = vsel %vm74, %v1379, 0.0
    %1382 = vadd.xlane.f32.xlu0 %v1381
    %v1383 = vpop.xlane.xlu0 %1382
    %v1384 = vsel %vm74, %v1380, 0.0
    %1385 = vadd.xlane.f32.xlu0 %v1384
    %v1386 = vpop.xlane.xlu0 %1385
    %v1387 = vmul.f32 %v1383, %v87
    %v1388 = vmul.f32 %v1386, %v87
    %v1389 = vadd.f32 %v1387, 1e-12
    %v1390 = vadd.f32 %v1388, 1e-12
    %v1391 = vrsqrt.pop %v1389
    %v1392 = vmul.f32 %v1391, %v1389
    %v1393 = vmul.f32 %v1392, %v1391
    %v1394 = vmul.f32 0.5, %v1393
    %v1395 = vsub.f32 1.5, %v1394
    %v1396 = vmul.f32 %v1391, %v1395
    %vm1397 = vweird.f32 %v1389
    %vm1398 = vweird.f32 %v1391
    %vm1399 = vmor %vm1397, %vm1398
    %v1400 = vsel %vm1399, %v1391, %v1396
    %v1401 = vrsqrt.pop %v1390
    %v1402 = vmul.f32 %v1401, %v1390
    %v1403 = vmul.f32 %v1402, %v1401
    %v1404 = vmul.f32 0.5, %v1403
    %v1405 = vsub.f32 1.5, %v1404
    %v1406 = vmul.f32 %v1401, %v1405
    %vm1407 = vweird.f32 %v1390
    %vm1408 = vweird.f32 %v1401
    %vm1409 = vmor %vm1407, %vm1408
    %v1410 = vsel %vm1409, %v1401, %v1406
    %v1411 = vmul.f32 %v1377, %v1400
    %v1412 = vmul.f32 %v1378, %v1410
    %v1414 = vperm.slane %v1366, 0
    %v1416 = vmul.f32 %v1411, %v1414
    %v1417 = vmul.f32 %v1412, %v1414
    %v1419 = vperm.slane %v1368, 0
    %v1421 = vadd.f32 %v1416, %v1419
    %v1422 = vadd.f32 %v1417, %v1419
    %v1424 = vrot.slane %v1422, 7
    %vm1426 = vcmask 1040384
    %v1427 = vsel %vm1426, %v1421, %v1424
    %v1428 = vpack.c.bf16 %v1427, %v1427
    %v1429 = vld [vmem:[%s17] sm:$0xf]
    %v1430 = vld [vmem:[%s17 + $0x4] sm:$0xf]
    %v1431 = vld [vmem:[%s17 + $0x8] sm:$0xf]
    %v1432 = vld [vmem:[%s17 + $0xc] sm:$0xf]
    %v1433 = vld [vmem:[%s18] sm:$0x1]
    %v1435 = vperm.slane %v1433, 0
    %v1441 = vunpack.c.l.b16 %v1429
    %v1442 = vunpack.c.l.b16 %v1430
    %v1443 = vunpack.c.l.b16 %v1431
    %v1444 = vunpack.c.l.b16 %v1432
    %v1445 = vpack.c.b16 %v1442, %v1441
    %v1446 = vpack.c.b16 %v1444, %v1443
    %v1450 = vsel %vm74, %v1428, 0
    %1452 = vmatpush.bf16.msra.mxu0 0
    %1453 = vmatpush.bf16.msra.mxu0 0
    %1454 = vmatpush.bf16.msra.mxu0 0
    %1455 = vmatpush.bf16.msra.mxu0 0
    %1456 = vmatpush.bf16.msra.mxu0 0
    %1457 = vmatpush.bf16.msra.mxu0 0
    %1458 = vmatpush.bf16.msra.mxu0 %v1446
    %1459 = vmatpush.bf16.msra.mxu0 %v1445
    %1460 = vmatmul.bf16.gmra.mxu0 %v1450
    %v1461 = vpop.f32.mrf.mxu0
    %v1462 = vadd.f32 %v1435, %v1461
    %v1463 = vpop.f32.mrf.mxu0
    %1464 = vdwg.mxu0
    %v1465 = vtanh.pop %v1462
    %v1466 = vld [vmem:[%s2] sm:$0x3]
    %v1467 = vmul.f32 %v1465, %v1466
    %v1468 = vpack.c.bf16 %v1467, %v1467
    %v1469 = vld [vmem:[%s19] sm:$0xf]
    %v1470 = vld [vmem:[%s19 + $0x4] sm:$0xf]
    %v1471 = vld [vmem:[%s19 + $0x8] sm:$0xf]
    %v1472 = vld [vmem:[%s19 + $0xc] sm:$0xf]
    %v1473 = vld [vmem:[%s20] sm:$0x1]
    %v1475 = vperm.slane %v1473, 0
    %v1481 = vunpack.c.l.b16 %v1469
    %v1482 = vunpack.c.l.b16 %v1470
    %v1483 = vunpack.c.l.b16 %v1471
    %v1484 = vunpack.c.l.b16 %v1472
    %v1485 = vpack.c.b16 %v1482, %v1481
    %v1486 = vpack.c.b16 %v1484, %v1483
    %v1490 = vsel %vm74, %v1468, 0
    %1492 = vmatpush.bf16.msra.mxu0 0
    %1493 = vmatpush.bf16.msra.mxu0 0
    %1494 = vmatpush.bf16.msra.mxu0 0
    %1495 = vmatpush.bf16.msra.mxu0 0
    %1496 = vmatpush.bf16.msra.mxu0 0
    %1497 = vmatpush.bf16.msra.mxu0 0
    %1498 = vmatpush.bf16.msra.mxu0 %v1486
    %1499 = vmatpush.bf16.msra.mxu0 %v1485
    %1500 = vmatmul.bf16.gmra.mxu0 %v1490
    %v1501 = vpop.f32.mrf.mxu0
    %v1502 = vadd.f32 %v1475, %v1501
    %v1503 = vpop.f32.mrf.mxu0
    %1504 = vdwg.mxu0
    %1505 = vst [vmem:[#allocation3] sm:$0x3] %v1502
    // Predicated region
    $region86: #{emotion_classifier_forward.1} parent=1 // pred_check
      _
    $region87: #{emotion_classifier_forward.1} parent=1 // pred_check_branch
      %1507 = sbr.rel (0) target = $region89
    $region88: #{emotion_classifier_forward.1} parent=1 // pred_region
      %1509 = vsyncadd [#allocation4], 0
      %s1511 = sshll.u32 [#allocation3], 4
      %s1512 = int_to_ptr.vmem [resolvable:$true] %s1511
      %s1513 = sshll.u32 %s21, 4
      %s1514 = int_to_ptr.hbm [resolvable:$true] %s1513
      %1516 = dma.vmem_to_hbm [thread:$0]  %s1512, 32, %s1514, [#allocation4]
    $region89: #{emotion_classifier_forward.1} parent=1 // pred_fallthru
      _
    // Predicated region
    $region90: #{emotion_classifier_forward.1} parent=1 // pred_check
      _
    $region91: #{emotion_classifier_forward.1} parent=1 // pred_check_branch
      %1518 = sbr.rel (0) target = $region93
    $region92: #{emotion_classifier_forward.1} parent=1 // pred_region
      %1520 = dma.done [#allocation4], 32
    $region93: #{emotion_classifier_forward.1} parent=1 // pred_fallthru
      _
    %1521 = vsyncpa [#allocation4], 1

</llo_original>
